<compile_context>
chip_gen: v5e
topology: v5e:2x2
jax: 0.10.0
libtpu: 0.0.40
codegen_flags: <defaults>
</compile_context>

<pallas_src>
import functools

import jax
import jax.numpy as jnp
from jax.experimental import pallas as pl
from jax.experimental.pallas import tpu as pltpu

# ------------------------- model config (small, synthetic) ------------------
VOCAB = 64
SEQ = 8          # max sequence length
HID = 32         # hidden size
NHEADS = 2
DHEAD = HID // NHEADS
FFN = 64         # intermediate size
N_SEG = 2        # token-type vocabulary (BERT uses 2)


# ------------------------------ kernel helpers --------------------------------
def _layernorm(x, gamma, beta, eps=1e-12):
    mean = jnp.mean(x, axis=-1, keepdims=True)
    var = jnp.mean((x - mean) ** 2, axis=-1, keepdims=True)
    return (x - mean) * jax.lax.rsqrt(var + eps) * gamma + beta


def _gelu(x):
    # TODO(synk): HF BERT defaults to exact erf GELU; tanh approximation kept
    # here (difference ~1e-3 on pooled embeddings).
    c = 0.7978845608028654  # sqrt(2/pi)
    return 0.5 * x * (1.0 + jnp.tanh(c * (x + 0.044715 * x * x * x)))


# ------------------------------ Pallas kernel --------------------------------
def encoder_kernel(
    ids_ref, seg_ref, mask_ref,
    wemb_ref, pemb_ref, temb_ref, embg_ref, embb_ref,
    wqkv_ref, bqkv_ref, wo_ref, bo_ref,
    ln1_g_ref, ln1_b_ref,
    w1_ref, b1_ref, w2_ref, b2_ref,
    ln2_g_ref, ln2_b_ref,
    out_ref,
):
    bb = mask_ref.shape[0]                 # batch rows handled in this block
    rows = bb * SEQ

    # --- fused embeddings (word one-hot matmul + token-type select + pos) ----
    ids = ids_ref[...]                     # (rows, 1) int32
    segs = seg_ref[...]                    # (rows, 1) int32

    word_oh = (ids == jax.lax.broadcasted_iota(jnp.int32, (rows, VOCAB), 1)
               ).astype(jnp.float32)                       # (rows, VOCAB)
    x = jnp.dot(word_oh, wemb_ref[...],
                preferred_element_type=jnp.float32)         # (rows, HID) via MXU

    # token-type embedding: exact 2-way select (N_SEG == 2, as in BERT).
    # TODO(synk): generalize to >2 token types with a one-hot matmul.
    temb = temb_ref[...]                                    # (2, HID)
    segs_f = segs.astype(jnp.float32)                       # (rows, 1)
    x = x + temb[0] + segs_f * (temb[1] - temb[0])

    # positional embedding broadcast across the batch.
    x = (x.reshape(bb, SEQ, HID) + pemb_ref[...][None, :, :]).reshape(rows, HID)

    # embedding layer norm
    x = _layernorm(x, embg_ref[...], embb_ref[...])

    # additive attention bias built in-kernel from the raw int mask.
    nbias = (1.0 - mask_ref[...].astype(jnp.float32)) * -1e9   # (bb, 1, SEQ)

    # --- fused QKV projection over the whole batch block (M = rows) ---------
    qkv = jnp.dot(x, wqkv_ref[...], preferred_element_type=jnp.float32) + bqkv_ref[...]
    q = qkv[:, 0 * HID:1 * HID].reshape(bb, SEQ, HID)
    k = qkv[:, 1 * HID:2 * HID].reshape(bb, SEQ, HID)
    v = qkv[:, 2 * HID:3 * HID].reshape(bb, SEQ, HID)

    wo = wo_ref[...]
    scale = 1.0 / (DHEAD ** 0.5)

    # --- multi-head self attention (batched contractions per head) ----------
    attn = None
    for h in range(NHEADS):                       # static, tiny head count
        sl = slice(h * DHEAD, (h + 1) * DHEAD)
        qh, kh, vh = q[:, :, sl], k[:, :, sl], v[:, :, sl]
        s = jnp.einsum("bqd,bkd->bqk", qh, kh,
                       preferred_element_type=jnp.float32) * scale + nbias
        s = s - jnp.max(s, axis=-1, keepdims=True)
        p = jnp.exp(s)
        p = p * pl.reciprocal(jnp.sum(p, axis=-1, keepdims=True), approx=True)
        ctx = jnp.einsum("bqk,bkd->bqd", p, vh,
                         preferred_element_type=jnp.float32)       # (bb,SEQ,DHEAD)
        # Summing per-head projections with a row-slice of Wo is identical to
        # concat(heads) @ Wo but avoids the cross-lane concatenate.
        part = jnp.dot(ctx.reshape(rows, DHEAD), wo[sl, :],
                       preferred_element_type=jnp.float32)
        attn = part if attn is None else attn + part
    attn = attn + bo_ref[...]

    x1 = _layernorm(x + attn, ln1_g_ref[...], ln1_b_ref[...])

    # --- feed forward --------------------------------------------------------
    ff = jnp.dot(x1, w1_ref[...], preferred_element_type=jnp.float32) + b1_ref[...]
    ff = _gelu(ff)
    ff = jnp.dot(ff, w2_ref[...], preferred_element_type=jnp.float32) + b2_ref[...]

    out_ref[...] = _layernorm(x1 + ff, ln2_g_ref[...], ln2_b_ref[...])


# ------------------------------ encoder wrapper -------------------------------
@functools.partial(jax.jit, static_argnames=("representation_token_pos",))
def encoder_forward(ids, segments, attn_mask, params, representation_token_pos=0):
    """Returns (sequence_output, pooled_output, hidden_states=None)."""
    B, S = ids.shape
    assert S == SEQ

    ids2 = ids.reshape(B * S, 1).astype(jnp.int32)
    seg2 = segments.reshape(B * S, 1).astype(jnp.int32)
    mask3 = attn_mask.reshape(B, 1, S).astype(jnp.int32)

    # Collapse the per-row grid: one block per core.  On even batches use a
    # 2-step "parallel" grid so v7x's two TensorCores each take half the batch.
    G = 2 if (B % 2 == 0 and B >= 2) else 1
    BB = B // G

    wfull = lambda i: (0, 0)
    seq2 = pl.pallas_call(
        encoder_kernel,
        out_shape=jax.ShapeDtypeStruct((B * S, HID), jnp.float32),
        grid=(G,),
        in_specs=[
            pl.BlockSpec((BB * S, 1), lambda i: (i, 0)),        # token ids
            pl.BlockSpec((BB * S, 1), lambda i: (i, 0)),        # segment ids
            pl.BlockSpec((BB, 1, S), lambda i: (i, 0, 0)),      # attention mask
            pl.BlockSpec((VOCAB, HID), wfull),                  # word embedding table
            pl.BlockSpec((SEQ, HID), wfull),                    # positional embedding
            pl.BlockSpec((N_SEG, HID), wfull),                  # token-type embedding
            pl.BlockSpec((1, HID), wfull),                      # emb LN gamma
            pl.BlockSpec((1, HID), wfull),                      # emb LN beta
            pl.BlockSpec((HID, 3 * HID), wfull),                # Wqkv
            pl.BlockSpec((1, 3 * HID), wfull),                  # bqkv
            pl.BlockSpec((HID, HID), wfull),                    # Wo
            pl.BlockSpec((1, HID), wfull),                      # bo
            pl.BlockSpec((1, HID), wfull),                      # ln1 gamma
            pl.BlockSpec((1, HID), wfull),                      # ln1 beta
            pl.BlockSpec((HID, FFN), wfull),                    # W1
            pl.BlockSpec((1, FFN), wfull),                      # b1
            pl.BlockSpec((FFN, HID), wfull),                    # W2
            pl.BlockSpec((1, HID), wfull),                      # b2
            pl.BlockSpec((1, HID), wfull),                      # ln2 gamma
            pl.BlockSpec((1, HID), wfull),                      # ln2 beta
        ],
        out_specs=pl.BlockSpec((BB * S, HID), lambda i: (i, 0)),
        compiler_params=pltpu.CompilerParams(
            dimension_semantics=("parallel",)),
    )(
        ids2, seg2, mask3,
        params["word_emb"], params["pos_emb"], params["tok_emb"],
        params["emb_g"], params["emb_b"],
        params["wqkv"], params["bqkv"], params["wo"], params["bo"],
        params["ln1_g"], params["ln1_b"],
        params["w1"], params["b1"], params["w2"], params["b2"],
        params["ln2_g"], params["ln2_b"],
    )

    seq_out = seq2.reshape(B, S, HID)
    # Pooled output sliced in the wrapper (kernel does not emit a 32-lane
    # masked partial store).
    pooled = seq_out[:, representation_token_pos, :]
    # TODO(synk): DPR also allows a per-sample tensor of representation
    # positions; only a static int position is supported here.
    return seq_out, pooled, None


# ------------------------------ parameter init --------------------------------
def init_encoder_params(key):
    ks = jax.random.split(key, 12)
    s = 0.02
    return {
        "word_emb": s * jax.random.normal(ks[0], (VOCAB, HID), jnp.float32),
        "pos_emb": s * jax.random.normal(ks[1], (SEQ, HID), jnp.float32),
        "tok_emb": s * jax.random.normal(ks[2], (N_SEG, HID), jnp.float32),
        "emb_g": jnp.ones((1, HID), jnp.float32),
        "emb_b": jnp.zeros((1, HID), jnp.float32),
        "wqkv": s * jax.random.normal(ks[3], (HID, 3 * HID), jnp.float32),
        "bqkv": jnp.zeros((1, 3 * HID), jnp.float32),
        "wo": s * jax.random.normal(ks[4], (HID, HID), jnp.float32),
        "bo": jnp.zeros((1, HID), jnp.float32),
        "ln1_g": jnp.ones((1, HID), jnp.float32),
        "ln1_b": jnp.zeros((1, HID), jnp.float32),
        "w1": s * jax.random.normal(ks[5], (HID, FFN), jnp.float32),
        "b1": jnp.zeros((1, FFN), jnp.float32),
        "w2": s * jax.random.normal(ks[6], (FFN, HID), jnp.float32),
        "b2": jnp.zeros((1, HID), jnp.float32),
        "ln2_g": jnp.ones((1, HID), jnp.float32),
        "ln2_b": jnp.zeros((1, HID), jnp.float32),
    }
    # TODO(synk): at real DPR/BERT-base dims use bf16 weights + K-tiled FFN
    # with a VMEM f32 accumulator to fit v7x's 64 MiB VMEM.


# ------------------------------ BiEncoder --------------------------------------
class BiEncoder:
    """JAX/Pallas port of dpr.models.biencoder.BiEncoder forward pass."""

    def __init__(self, question_params, ctx_params,
                 fix_q_encoder=False, fix_ctx_encoder=False):
        self.question_params = question_params
        self.ctx_params = ctx_params
        self.fix_q_encoder = fix_q_encoder
        self.fix_ctx_encoder = fix_ctx_encoder

    @staticmethod
    def get_representation(params, ids, segments, attn_mask,
                           fix_encoder=False, representation_token_pos=0):
        if ids is None:
            return None, None, None
        outputs = encoder_forward(
            ids, segments, attn_mask, params,
            representation_token_pos=int(representation_token_pos))
        if fix_encoder:
            # torch.no_grad() equivalent: block gradient flow
            outputs = tuple(jax.lax.stop_gradient(o) if o is not None else None
                            for o in outputs)
        return outputs

    def forward(self, question_ids, question_segments, question_attn_mask,
                context_ids, ctx_segments, ctx_attn_mask,
                encoder_type=None, representation_token_pos=0):
        q_params = (self.question_params
                    if encoder_type is None or encoder_type == "question"
                    else self.ctx_params)
        q_outputs = self.get_representation(
            q_params, question_ids, question_segments, question_attn_mask,
            self.fix_q_encoder, representation_token_pos)
        q_pooled_out = q_outputs[1]

        ctx_params = (self.ctx_params
                      if encoder_type is None or encoder_type == "ctx"
                      else self.question_params)
        ctx_outputs = self.get_representation(
            ctx_params, context_ids, ctx_segments, ctx_attn_mask,
            self.fix_ctx_encoder, representation_token_pos)
        ctx_pooled_out = ctx_outputs[1]
        return q_pooled_out, ctx_pooled_out

    __call__ = forward

    # TODO(synk): create_biencoder_input / load_state are data-pipeline /
    # checkpoint utilities with no kernel equivalent; omitted.


# ------------------------------ main --------------------------------------------
if __name__ == "__main__":
    root = jax.random.PRNGKey(0)
    kq, kc, k_ids_q, k_ids_c = jax.random.split(root, 4)

    biencoder = BiEncoder(init_encoder_params(kq), init_encoder_params(kc))

    B_Q, B_CTX = 2, 4
    question_ids = jax.random.randint(k_ids_q, (B_Q, SEQ), 0, VOCAB, jnp.int32)
    context_ids = jax.random.randint(k_ids_c, (B_CTX, SEQ), 0, VOCAB, jnp.int32)
    question_segments = jnp.zeros((B_Q, SEQ), jnp.int32)
    ctx_segments = jnp.zeros((B_CTX, SEQ), jnp.int32)
    # attention masks: last two tokens of each context are padding
    question_attn_mask = jnp.ones((B_Q, SEQ), jnp.int32)
    ctx_attn_mask = jnp.concatenate(
        [jnp.ones((B_CTX, SEQ - 2), jnp.int32), jnp.zeros((B_CTX, 2), jnp.int32)],
        axis=1)

    q_pooled, ctx_pooled = biencoder(
        question_ids, question_segments, question_attn_mask,
        context_ids, ctx_segments, ctx_attn_mask)

    q_pooled = jax.block_until_ready(q_pooled)
    ctx_pooled = jax.block_until_ready(ctx_pooled)

    assert q_pooled.shape == (B_Q, HID)
    assert ctx_pooled.shape == (B_CTX, HID)
    assert jnp.all(jnp.isfinite(q_pooled)) and jnp.all(jnp.isfinite(ctx_pooled))
    print("KERNEL_OK")
</pallas_src>

<mosaic_0001>
module attributes {stable_mosaic.version = 11 : i64} {
  func.func @encoder_kernel(%arg0: i32, %arg1: memref<8x1xi32, #tpu.memory_space<vmem>>, %arg2: memref<8x1xi32, #tpu.memory_space<vmem>>, %arg3: memref<1x1x8xi32, #tpu.memory_space<vmem>>, %arg4: memref<64x32xf32, #tpu.memory_space<vmem>>, %arg5: memref<8x32xf32, #tpu.memory_space<vmem>>, %arg6: memref<2x32xf32, #tpu.memory_space<vmem>>, %arg7: memref<1x32xf32, #tpu.memory_space<vmem>>, %arg8: memref<1x32xf32, #tpu.memory_space<vmem>>, %arg9: memref<32x96xf32, #tpu.memory_space<vmem>>, %arg10: memref<1x96xf32, #tpu.memory_space<vmem>>, %arg11: memref<32x32xf32, #tpu.memory_space<vmem>>, %arg12: memref<1x32xf32, #tpu.memory_space<vmem>>, %arg13: memref<1x32xf32, #tpu.memory_space<vmem>>, %arg14: memref<1x32xf32, #tpu.memory_space<vmem>>, %arg15: memref<32x64xf32, #tpu.memory_space<vmem>>, %arg16: memref<1x64xf32, #tpu.memory_space<vmem>>, %arg17: memref<64x32xf32, #tpu.memory_space<vmem>>, %arg18: memref<1x32xf32, #tpu.memory_space<vmem>>, %arg19: memref<1x32xf32, #tpu.memory_space<vmem>>, %arg20: memref<1x32xf32, #tpu.memory_space<vmem>>, %arg21: memref<8x32xf32, #tpu.memory_space<vmem>>) attributes {dimension_semantics = [#tpu.dimension_semantics<parallel>], iteration_bounds = array<i64: 2>, scalar_prefetch = 0 : i64, scratch_operands = 0 : i64, tpu.core_type = #tpu.core_type<tc>, window_params = [{transform_indices = @transform_0, window_bounds = array<i64: 8, 1>}, {transform_indices = @transform_1, window_bounds = array<i64: 8, 1>}, {transform_indices = @transform_2, window_bounds = array<i64: 1, 1, 8>}, {pipeline_mode = #tpu.pipeline_mode<synchronous>, transform_indices = @transform_3, window_bounds = array<i64: 64, 32>}, {pipeline_mode = #tpu.pipeline_mode<synchronous>, transform_indices = @transform_4, window_bounds = array<i64: 8, 32>}, {pipeline_mode = #tpu.pipeline_mode<synchronous>, transform_indices = @transform_5, window_bounds = array<i64: 2, 32>}, {pipeline_mode = #tpu.pipeline_mode<synchronous>, transform_indices = @transform_6, window_bounds = array<i64: 1, 32>}, {pipeline_mode = #tpu.pipeline_mode<synchronous>, transform_indices = @transform_7, window_bounds = array<i64: 1, 32>}, {pipeline_mode = #tpu.pipeline_mode<synchronous>, transform_indices = @transform_8, window_bounds = array<i64: 32, 96>}, {pipeline_mode = #tpu.pipeline_mode<synchronous>, transform_indices = @transform_9, window_bounds = array<i64: 1, 96>}, {pipeline_mode = #tpu.pipeline_mode<synchronous>, transform_indices = @transform_10, window_bounds = array<i64: 32, 32>}, {pipeline_mode = #tpu.pipeline_mode<synchronous>, transform_indices = @transform_11, window_bounds = array<i64: 1, 32>}, {pipeline_mode = #tpu.pipeline_mode<synchronous>, transform_indices = @transform_12, window_bounds = array<i64: 1, 32>}, {pipeline_mode = #tpu.pipeline_mode<synchronous>, transform_indices = @transform_13, window_bounds = array<i64: 1, 32>}, {pipeline_mode = #tpu.pipeline_mode<synchronous>, transform_indices = @transform_14, window_bounds = array<i64: 32, 64>}, {pipeline_mode = #tpu.pipeline_mode<synchronous>, transform_indices = @transform_15, window_bounds = array<i64: 1, 64>}, {pipeline_mode = #tpu.pipeline_mode<synchronous>, transform_indices = @transform_16, window_bounds = array<i64: 64, 32>}, {pipeline_mode = #tpu.pipeline_mode<synchronous>, transform_indices = @transform_17, window_bounds = array<i64: 1, 32>}, {pipeline_mode = #tpu.pipeline_mode<synchronous>, transform_indices = @transform_18, window_bounds = array<i64: 1, 32>}, {pipeline_mode = #tpu.pipeline_mode<synchronous>, transform_indices = @transform_19, window_bounds = array<i64: 1, 32>}, {transform_indices = @transform_20, window_bounds = array<i64: 8, 32>}]} {
    %c0 = arith.constant 0 : index
    %c0_0 = arith.constant 0 : index
    %0 = vector.load %arg1[%c0, %c0_0] : memref<8x1xi32, #tpu.memory_space<vmem>>, vector<8x1xi32>
    %c0_1 = arith.constant 0 : index
    %c0_2 = arith.constant 0 : index
    %1 = vector.load %arg2[%c0_1, %c0_2] : memref<8x1xi32, #tpu.memory_space<vmem>>, vector<8x1xi32>
    %2 = tpu.iota {dimensions = array<i32: 1>} : vector<8x64xi32>
    %3 = vector.broadcast %0 : vector<8x1xi32> to vector<8x64xi32>
    %4 = arith.cmpi eq, %3, %2 : vector<8x64xi32>
    %5 = arith.extui %4 : vector<8x64xi1> to vector<8x64xi32>
    %6 = arith.sitofp %5 : vector<8x64xi32> to vector<8x64xf32>
    %c0_3 = arith.constant 0 : index
    %c0_4 = arith.constant 0 : index
    %7 = vector.load %arg4[%c0_3, %c0_4] : memref<64x32xf32, #tpu.memory_space<vmem>>, vector<64x32xf32>
    %cst = arith.constant dense<0.000000e+00> : vector<8x32xf32>
    %8 = tpu.matmul %6, %7, %cst {dimension_numbers = #tpu.dot_dimension_numbers<[1], [0], [0], [1], [0, 0, 1, 1], [], []>} : vector<8x64xf32>, vector<64x32xf32>, vector<8x32xf32> -> vector<8x32xf32>
    %c0_5 = arith.constant 0 : index
    %c0_6 = arith.constant 0 : index
    %9 = vector.load %arg6[%c0_5, %c0_6] : memref<2x32xf32, #tpu.memory_space<vmem>>, vector<2x32xf32>
    %10 = arith.sitofp %1 : vector<8x1xi32> to vector<8x1xf32>
    %11 = vector.extract_strided_slice %9 {offsets = [0, 0], sizes = [1, 32], strides = [1, 1]} : vector<2x32xf32> to vector<1x32xf32>
    %12 = vector.shape_cast %11 : vector<1x32xf32> to vector<32xf32>
    %13 = vector.shape_cast %12 : vector<32xf32> to vector<1x32xf32>
    %14 = vector.broadcast %13 : vector<1x32xf32> to vector<8x32xf32>
    %15 = arith.addf %8, %14 : vector<8x32xf32>
    %16 = vector.extract_strided_slice %9 {offsets = [1, 0], sizes = [1, 32], strides = [1, 1]} : vector<2x32xf32> to vector<1x32xf32>
    %17 = vector.shape_cast %16 : vector<1x32xf32> to vector<32xf32>
    %18 = vector.extract_strided_slice %9 {offsets = [0, 0], sizes = [1, 32], strides = [1, 1]} : vector<2x32xf32> to vector<1x32xf32>
    %19 = vector.shape_cast %18 : vector<1x32xf32> to vector<32xf32>
    %20 = arith.subf %17, %19 : vector<32xf32>
    %21 = vector.shape_cast %20 : vector<32xf32> to vector<1x32xf32>
    %22 = vector.broadcast %10 : vector<8x1xf32> to vector<8x32xf32>
    %23 = vector.broadcast %21 : vector<1x32xf32> to vector<8x32xf32>
    %24 = arith.mulf %22, %23 : vector<8x32xf32>
    %25 = arith.addf %15, %24 : vector<8x32xf32>
    %26 = vector.shape_cast %25 : vector<8x32xf32> to vector<1x8x32xf32>
    %c0_7 = arith.constant 0 : index
    %c0_8 = arith.constant 0 : index
    %27 = vector.load %arg5[%c0_7, %c0_8] : memref<8x32xf32, #tpu.memory_space<vmem>>, vector<8x32xf32>
    %28 = vector.shape_cast %27 : vector<8x32xf32> to vector<1x8x32xf32>
    %29 = arith.addf %26, %28 : vector<1x8x32xf32>
    %30 = vector.shape_cast %29 : vector<1x8x32xf32> to vector<8x32xf32>
    %c0_9 = arith.constant 0 : index
    %c0_10 = arith.constant 0 : index
    %31 = vector.load %arg7[%c0_9, %c0_10] : memref<1x32xf32, #tpu.memory_space<vmem>>, vector<1x32xf32>
    %c0_11 = arith.constant 0 : index
    %c0_12 = arith.constant 0 : index
    %32 = vector.load %arg8[%c0_11, %c0_12] : memref<1x32xf32, #tpu.memory_space<vmem>>, vector<1x32xf32>
    %cst_13 = arith.constant dense<0.000000e+00> : vector<8xf32>
    %33 = vector.multi_reduction <add>, %30, %cst_13 [1] : vector<8x32xf32> to vector<8xf32>
    %34 = vector.shape_cast %33 : vector<8xf32> to vector<8x1xf32>
    %cst_14 = arith.constant 3.200000e+01 : f32
    %35 = vector.broadcast %cst_14 : f32 to vector<8x1xf32>
    %36 = arith.divf %34, %35 : vector<8x1xf32>
    %37 = vector.broadcast %36 : vector<8x1xf32> to vector<8x32xf32>
    %38 = arith.subf %30, %37 : vector<8x32xf32>
    %39 = arith.mulf %38, %38 : vector<8x32xf32>
    %cst_15 = arith.constant dense<0.000000e+00> : vector<8xf32>
    %40 = vector.multi_reduction <add>, %39, %cst_15 [1] : vector<8x32xf32> to vector<8xf32>
    %41 = vector.shape_cast %40 : vector<8xf32> to vector<8x1xf32>
    %cst_16 = arith.constant 3.200000e+01 : f32
    %42 = vector.broadcast %cst_16 : f32 to vector<8x1xf32>
    %43 = arith.divf %41, %42 : vector<8x1xf32>
    %44 = vector.broadcast %36 : vector<8x1xf32> to vector<8x32xf32>
    %45 = arith.subf %30, %44 : vector<8x32xf32>
    %cst_17 = arith.constant 9.99999996E-13 : f32
    %46 = vector.broadcast %cst_17 : f32 to vector<8x1xf32>
    %47 = arith.addf %43, %46 : vector<8x1xf32>
    %48 = math.rsqrt %47 : vector<8x1xf32>
    %49 = vector.broadcast %48 : vector<8x1xf32> to vector<8x32xf32>
    %50 = arith.mulf %45, %49 : vector<8x32xf32>
    %51 = vector.broadcast %31 : vector<1x32xf32> to vector<8x32xf32>
    %52 = arith.mulf %50, %51 : vector<8x32xf32>
    %53 = vector.broadcast %32 : vector<1x32xf32> to vector<8x32xf32>
    %54 = arith.addf %52, %53 : vector<8x32xf32>
    %c0_18 = arith.constant 0 : index
    %c0_19 = arith.constant 0 : index
    %c0_20 = arith.constant 0 : index
    %55 = vector.load %arg3[%c0_18, %c0_19, %c0_20] : memref<1x1x8xi32, #tpu.memory_space<vmem>>, vector<1x1x8xi32>
    %56 = arith.sitofp %55 : vector<1x1x8xi32> to vector<1x1x8xf32>
    %cst_21 = arith.constant 1.000000e+00 : f32
    %57 = vector.broadcast %cst_21 : f32 to vector<1x1x8xf32>
    %58 = arith.subf %57, %56 : vector<1x1x8xf32>
    %cst_22 = arith.constant -1.000000e+09 : f32
    %59 = vector.broadcast %cst_22 : f32 to vector<1x1x8xf32>
    %60 = arith.mulf %58, %59 : vector<1x1x8xf32>
    %c0_23 = arith.constant 0 : index
    %c0_24 = arith.constant 0 : index
    %61 = vector.load %arg9[%c0_23, %c0_24] : memref<32x96xf32, #tpu.memory_space<vmem>>, vector<32x96xf32>
    %cst_25 = arith.constant dense<0.000000e+00> : vector<8x96xf32>
    %62 = tpu.matmul %54, %61, %cst_25 {dimension_numbers = #tpu.dot_dimension_numbers<[1], [0], [0], [1], [0, 0, 1, 1], [], []>} : vector<8x32xf32>, vector<32x96xf32>, vector<8x96xf32> -> vector<8x96xf32>
    %c0_26 = arith.constant 0 : index
    %c0_27 = arith.constant 0 : index
    %63 = vector.load %arg10[%c0_26, %c0_27] : memref<1x96xf32, #tpu.memory_space<vmem>>, vector<1x96xf32>
    %64 = vector.broadcast %63 : vector<1x96xf32> to vector<8x96xf32>
    %65 = arith.addf %62, %64 : vector<8x96xf32>
    %66 = vector.extract_strided_slice %65 {offsets = [0, 0], sizes = [8, 32], strides = [1, 1]} : vector<8x96xf32> to vector<8x32xf32>
    %67 = vector.shape_cast %66 : vector<8x32xf32> to vector<1x8x32xf32>
    %68 = vector.extract_strided_slice %65 {offsets = [0, 32], sizes = [8, 32], strides = [1, 1]} : vector<8x96xf32> to vector<8x32xf32>
    %69 = vector.shape_cast %68 : vector<8x32xf32> to vector<1x8x32xf32>
    %70 = vector.extract_strided_slice %65 {offsets = [0, 64], sizes = [8, 32], strides = [1, 1]} : vector<8x96xf32> to vector<8x32xf32>
    %71 = vector.shape_cast %70 : vector<8x32xf32> to vector<1x8x32xf32>
    %c0_28 = arith.constant 0 : index
    %c0_29 = arith.constant 0 : index
    %72 = vector.load %arg11[%c0_28, %c0_29] : memref<32x32xf32, #tpu.memory_space<vmem>>, vector<32x32xf32>
    %73 = vector.extract_strided_slice %67 {offsets = [0, 0, 0], sizes = [1, 8, 16], strides = [1, 1, 1]} : vector<1x8x32xf32> to vector<1x8x16xf32>
    %74 = vector.extract_strided_slice %69 {offsets = [0, 0, 0], sizes = [1, 8, 16], strides = [1, 1, 1]} : vector<1x8x32xf32> to vector<1x8x16xf32>
    %75 = vector.extract_strided_slice %71 {offsets = [0, 0, 0], sizes = [1, 8, 16], strides = [1, 1, 1]} : vector<1x8x32xf32> to vector<1x8x16xf32>
    "tpu.trace_start"() <{level = 10 : i32, message = "bqd,bkd->bqk"}> : () -> ()
    %cst_30 = arith.constant dense<0.000000e+00> : vector<1x8x8xf32>
    %76 = tpu.matmul %73, %74, %cst_30 {dimension_numbers = #tpu.dot_dimension_numbers<[2], [2], [1], [1], [0, 0, 0, 1, 1, 1], [0], [0]>} : vector<1x8x16xf32>, vector<1x8x16xf32>, vector<1x8x8xf32> -> vector<1x8x8xf32>
    "tpu.trace_stop"() : () -> ()
    %cst_31 = arith.constant 2.500000e-01 : f32
    %77 = vector.broadcast %cst_31 : f32 to vector<1x8x8xf32>
    %78 = arith.mulf %76, %77 : vector<1x8x8xf32>
    %79 = vector.broadcast %60 : vector<1x1x8xf32> to vector<1x8x8xf32>
    %80 = arith.addf %78, %79 : vector<1x8x8xf32>
    %cst_32 = arith.constant dense<0xFF800000> : vector<1x8xf32>
    %81 = vector.multi_reduction <maximumf>, %80, %cst_32 [2] : vector<1x8x8xf32> to vector<1x8xf32>
    %82 = vector.shape_cast %81 : vector<1x8xf32> to vector<1x8x1xf32>
    %83 = vector.broadcast %82 : vector<1x8x1xf32> to vector<1x8x8xf32>
    %84 = arith.subf %80, %83 : vector<1x8x8xf32>
    %85 = math.exp %84 : vector<1x8x8xf32>
    %cst_33 = arith.constant dense<0.000000e+00> : vector<1x8xf32>
    %86 = vector.multi_reduction <add>, %85, %cst_33 [2] : vector<1x8x8xf32> to vector<1x8xf32>
    %87 = vector.shape_cast %86 : vector<1x8xf32> to vector<1x8x1xf32>
    %88 = tpu.reciprocal %87 {approx = true} : vector<1x8x1xf32> -> vector<1x8x1xf32>
    %89 = vector.broadcast %88 : vector<1x8x1xf32> to vector<1x8x8xf32>
    %90 = arith.mulf %85, %89 : vector<1x8x8xf32>
    "tpu.trace_start"() <{level = 10 : i32, message = "bqk,bkd->bqd"}> : () -> ()
    %cst_34 = arith.constant dense<0.000000e+00> : vector<1x8x16xf32>
    %91 = tpu.matmul %90, %75, %cst_34 {dimension_numbers = #tpu.dot_dimension_numbers<[2], [1], [1], [2], [0, 0, 0, 1, 1, 2], [0], [0]>} : vector<1x8x8xf32>, vector<1x8x16xf32>, vector<1x8x16xf32> -> vector<1x8x16xf32>
    "tpu.trace_stop"() : () -> ()
    %92 = vector.shape_cast %91 : vector<1x8x16xf32> to vector<8x16xf32>
    %93 = vector.extract_strided_slice %72 {offsets = [0, 0], sizes = [16, 32], strides = [1, 1]} : vector<32x32xf32> to vector<16x32xf32>
    %cst_35 = arith.constant dense<0.000000e+00> : vector<8x32xf32>
    %94 = tpu.matmul %92, %93, %cst_35 {dimension_numbers = #tpu.dot_dimension_numbers<[1], [0], [0], [1], [0, 0, 1, 1], [], []>} : vector<8x16xf32>, vector<16x32xf32>, vector<8x32xf32> -> vector<8x32xf32>
    %95 = vector.extract_strided_slice %67 {offsets = [0, 0, 16], sizes = [1, 8, 16], strides = [1, 1, 1]} : vector<1x8x32xf32> to vector<1x8x16xf32>
    %96 = vector.extract_strided_slice %69 {offsets = [0, 0, 16], sizes = [1, 8, 16], strides = [1, 1, 1]} : vector<1x8x32xf32> to vector<1x8x16xf32>
    %97 = vector.extract_strided_slice %71 {offsets = [0, 0, 16], sizes = [1, 8, 16], strides = [1, 1, 1]} : vector<1x8x32xf32> to vector<1x8x16xf32>
    "tpu.trace_start"() <{level = 10 : i32, message = "bqd,bkd->bqk"}> : () -> ()
    %cst_36 = arith.constant dense<0.000000e+00> : vector<1x8x8xf32>
    %98 = tpu.matmul %95, %96, %cst_36 {dimension_numbers = #tpu.dot_dimension_numbers<[2], [2], [1], [1], [0, 0, 0, 1, 1, 1], [0], [0]>} : vector<1x8x16xf32>, vector<1x8x16xf32>, vector<1x8x8xf32> -> vector<1x8x8xf32>
    "tpu.trace_stop"() : () -> ()
    %cst_37 = arith.constant 2.500000e-01 : f32
    %99 = vector.broadcast %cst_37 : f32 to vector<1x8x8xf32>
    %100 = arith.mulf %98, %99 : vector<1x8x8xf32>
    %101 = vector.broadcast %60 : vector<1x1x8xf32> to vector<1x8x8xf32>
    %102 = arith.addf %100, %101 : vector<1x8x8xf32>
    %cst_38 = arith.constant dense<0xFF800000> : vector<1x8xf32>
    %103 = vector.multi_reduction <maximumf>, %102, %cst_38 [2] : vector<1x8x8xf32> to vector<1x8xf32>
    %104 = vector.shape_cast %103 : vector<1x8xf32> to vector<1x8x1xf32>
    %105 = vector.broadcast %104 : vector<1x8x1xf32> to vector<1x8x8xf32>
    %106 = arith.subf %102, %105 : vector<1x8x8xf32>
    %107 = math.exp %106 : vector<1x8x8xf32>
    %cst_39 = arith.constant dense<0.000000e+00> : vector<1x8xf32>
    %108 = vector.multi_reduction <add>, %107, %cst_39 [2] : vector<1x8x8xf32> to vector<1x8xf32>
    %109 = vector.shape_cast %108 : vector<1x8xf32> to vector<1x8x1xf32>
    %110 = tpu.reciprocal %109 {approx = true} : vector<1x8x1xf32> -> vector<1x8x1xf32>
    %111 = vector.broadcast %110 : vector<1x8x1xf32> to vector<1x8x8xf32>
    %112 = arith.mulf %107, %111 : vector<1x8x8xf32>
    "tpu.trace_start"() <{level = 10 : i32, message = "bqk,bkd->bqd"}> : () -> ()
    %cst_40 = arith.constant dense<0.000000e+00> : vector<1x8x16xf32>
    %113 = tpu.matmul %112, %97, %cst_40 {dimension_numbers = #tpu.dot_dimension_numbers<[2], [1], [1], [2], [0, 0, 0, 1, 1, 2], [0], [0]>} : vector<1x8x8xf32>, vector<1x8x16xf32>, vector<1x8x16xf32> -> vector<1x8x16xf32>
    "tpu.trace_stop"() : () -> ()
    %114 = vector.shape_cast %113 : vector<1x8x16xf32> to vector<8x16xf32>
    %115 = vector.extract_strided_slice %72 {offsets = [16, 0], sizes = [16, 32], strides = [1, 1]} : vector<32x32xf32> to vector<16x32xf32>
    %cst_41 = arith.constant dense<0.000000e+00> : vector<8x32xf32>
    %116 = tpu.matmul %114, %115, %cst_41 {dimension_numbers = #tpu.dot_dimension_numbers<[1], [0], [0], [1], [0, 0, 1, 1], [], []>} : vector<8x16xf32>, vector<16x32xf32>, vector<8x32xf32> -> vector<8x32xf32>
    %117 = arith.addf %94, %116 : vector<8x32xf32>
    %c0_42 = arith.constant 0 : index
    %c0_43 = arith.constant 0 : index
    %118 = vector.load %arg12[%c0_42, %c0_43] : memref<1x32xf32, #tpu.memory_space<vmem>>, vector<1x32xf32>
    %119 = vector.broadcast %118 : vector<1x32xf32> to vector<8x32xf32>
    %120 = arith.addf %117, %119 : vector<8x32xf32>
    %121 = arith.addf %54, %120 : vector<8x32xf32>
    %c0_44 = arith.constant 0 : index
    %c0_45 = arith.constant 0 : index
    %122 = vector.load %arg13[%c0_44, %c0_45] : memref<1x32xf32, #tpu.memory_space<vmem>>, vector<1x32xf32>
    %c0_46 = arith.constant 0 : index
    %c0_47 = arith.constant 0 : index
    %123 = vector.load %arg14[%c0_46, %c0_47] : memref<1x32xf32, #tpu.memory_space<vmem>>, vector<1x32xf32>
    %cst_48 = arith.constant dense<0.000000e+00> : vector<8xf32>
    %124 = vector.multi_reduction <add>, %121, %cst_48 [1] : vector<8x32xf32> to vector<8xf32>
    %125 = vector.shape_cast %124 : vector<8xf32> to vector<8x1xf32>
    %cst_49 = arith.constant 3.200000e+01 : f32
    %126 = vector.broadcast %cst_49 : f32 to vector<8x1xf32>
    %127 = arith.divf %125, %126 : vector<8x1xf32>
    %128 = vector.broadcast %127 : vector<8x1xf32> to vector<8x32xf32>
    %129 = arith.subf %121, %128 : vector<8x32xf32>
    %130 = arith.mulf %129, %129 : vector<8x32xf32>
    %cst_50 = arith.constant dense<0.000000e+00> : vector<8xf32>
    %131 = vector.multi_reduction <add>, %130, %cst_50 [1] : vector<8x32xf32> to vector<8xf32>
    %132 = vector.shape_cast %131 : vector<8xf32> to vector<8x1xf32>
    %cst_51 = arith.constant 3.200000e+01 : f32
    %133 = vector.broadcast %cst_51 : f32 to vector<8x1xf32>
    %134 = arith.divf %132, %133 : vector<8x1xf32>
    %135 = vector.broadcast %127 : vector<8x1xf32> to vector<8x32xf32>
    %136 = arith.subf %121, %135 : vector<8x32xf32>
    %cst_52 = arith.constant 9.99999996E-13 : f32
    %137 = vector.broadcast %cst_52 : f32 to vector<8x1xf32>
    %138 = arith.addf %134, %137 : vector<8x1xf32>
    %139 = math.rsqrt %138 : vector<8x1xf32>
    %140 = vector.broadcast %139 : vector<8x1xf32> to vector<8x32xf32>
    %141 = arith.mulf %136, %140 : vector<8x32xf32>
    %142 = vector.broadcast %122 : vector<1x32xf32> to vector<8x32xf32>
    %143 = arith.mulf %141, %142 : vector<8x32xf32>
    %144 = vector.broadcast %123 : vector<1x32xf32> to vector<8x32xf32>
    %145 = arith.addf %143, %144 : vector<8x32xf32>
    %c0_53 = arith.constant 0 : index
    %c0_54 = arith.constant 0 : index
    %146 = vector.load %arg15[%c0_53, %c0_54] : memref<32x64xf32, #tpu.memory_space<vmem>>, vector<32x64xf32>
    %cst_55 = arith.constant dense<0.000000e+00> : vector<8x64xf32>
    %147 = tpu.matmul %145, %146, %cst_55 {dimension_numbers = #tpu.dot_dimension_numbers<[1], [0], [0], [1], [0, 0, 1, 1], [], []>} : vector<8x32xf32>, vector<32x64xf32>, vector<8x64xf32> -> vector<8x64xf32>
    %c0_56 = arith.constant 0 : index
    %c0_57 = arith.constant 0 : index
    %148 = vector.load %arg16[%c0_56, %c0_57] : memref<1x64xf32, #tpu.memory_space<vmem>>, vector<1x64xf32>
    %149 = vector.broadcast %148 : vector<1x64xf32> to vector<8x64xf32>
    %150 = arith.addf %147, %149 : vector<8x64xf32>
    %cst_58 = arith.constant 5.000000e-01 : f32
    %151 = vector.broadcast %cst_58 : f32 to vector<8x64xf32>
    %152 = arith.mulf %151, %150 : vector<8x64xf32>
    %cst_59 = arith.constant 4.471500e-02 : f32
    %153 = vector.broadcast %cst_59 : f32 to vector<8x64xf32>
    %154 = arith.mulf %153, %150 : vector<8x64xf32>
    %155 = arith.mulf %154, %150 : vector<8x64xf32>
    %156 = arith.mulf %155, %150 : vector<8x64xf32>
    %157 = arith.addf %150, %156 : vector<8x64xf32>
    %cst_60 = arith.constant 0.797884583 : f32
    %158 = vector.broadcast %cst_60 : f32 to vector<8x64xf32>
    %159 = arith.mulf %158, %157 : vector<8x64xf32>
    %160 = math.tanh %159 : vector<8x64xf32>
    %cst_61 = arith.constant 1.000000e+00 : f32
    %161 = vector.broadcast %cst_61 : f32 to vector<8x64xf32>
    %162 = arith.addf %161, %160 : vector<8x64xf32>
    %163 = arith.mulf %152, %162 : vector<8x64xf32>
    %c0_62 = arith.constant 0 : index
    %c0_63 = arith.constant 0 : index
    %164 = vector.load %arg17[%c0_62, %c0_63] : memref<64x32xf32, #tpu.memory_space<vmem>>, vector<64x32xf32>
    %cst_64 = arith.constant dense<0.000000e+00> : vector<8x32xf32>
    %165 = tpu.matmul %163, %164, %cst_64 {dimension_numbers = #tpu.dot_dimension_numbers<[1], [0], [0], [1], [0, 0, 1, 1], [], []>} : vector<8x64xf32>, vector<64x32xf32>, vector<8x32xf32> -> vector<8x32xf32>
    %c0_65 = arith.constant 0 : index
    %c0_66 = arith.constant 0 : index
    %166 = vector.load %arg18[%c0_65, %c0_66] : memref<1x32xf32, #tpu.memory_space<vmem>>, vector<1x32xf32>
    %167 = vector.broadcast %166 : vector<1x32xf32> to vector<8x32xf32>
    %168 = arith.addf %165, %167 : vector<8x32xf32>
    %169 = arith.addf %145, %168 : vector<8x32xf32>
    %c0_67 = arith.constant 0 : index
    %c0_68 = arith.constant 0 : index
    %170 = vector.load %arg19[%c0_67, %c0_68] : memref<1x32xf32, #tpu.memory_space<vmem>>, vector<1x32xf32>
    %c0_69 = arith.constant 0 : index
    %c0_70 = arith.constant 0 : index
    %171 = vector.load %arg20[%c0_69, %c0_70] : memref<1x32xf32, #tpu.memory_space<vmem>>, vector<1x32xf32>
    %cst_71 = arith.constant dense<0.000000e+00> : vector<8xf32>
    %172 = vector.multi_reduction <add>, %169, %cst_71 [1] : vector<8x32xf32> to vector<8xf32>
    %173 = vector.shape_cast %172 : vector<8xf32> to vector<8x1xf32>
    %cst_72 = arith.constant 3.200000e+01 : f32
    %174 = vector.broadcast %cst_72 : f32 to vector<8x1xf32>
    %175 = arith.divf %173, %174 : vector<8x1xf32>
    %176 = vector.broadcast %175 : vector<8x1xf32> to vector<8x32xf32>
    %177 = arith.subf %169, %176 : vector<8x32xf32>
    %178 = arith.mulf %177, %177 : vector<8x32xf32>
    %cst_73 = arith.constant dense<0.000000e+00> : vector<8xf32>
    %179 = vector.multi_reduction <add>, %178, %cst_73 [1] : vector<8x32xf32> to vector<8xf32>
    %180 = vector.shape_cast %179 : vector<8xf32> to vector<8x1xf32>
    %cst_74 = arith.constant 3.200000e+01 : f32
    %181 = vector.broadcast %cst_74 : f32 to vector<8x1xf32>
    %182 = arith.divf %180, %181 : vector<8x1xf32>
    %183 = vector.broadcast %175 : vector<8x1xf32> to vector<8x32xf32>
    %184 = arith.subf %169, %183 : vector<8x32xf32>
    %cst_75 = arith.constant 9.99999996E-13 : f32
    %185 = vector.broadcast %cst_75 : f32 to vector<8x1xf32>
    %186 = arith.addf %182, %185 : vector<8x1xf32>
    %187 = math.rsqrt %186 : vector<8x1xf32>
    %188 = vector.broadcast %187 : vector<8x1xf32> to vector<8x32xf32>
    %189 = arith.mulf %184, %188 : vector<8x32xf32>
    %190 = vector.broadcast %170 : vector<1x32xf32> to vector<8x32xf32>
    %191 = arith.mulf %189, %190 : vector<8x32xf32>
    %192 = vector.broadcast %171 : vector<1x32xf32> to vector<8x32xf32>
    %193 = arith.addf %191, %192 : vector<8x32xf32>
    %c0_76 = arith.constant 0 : index
    %c0_77 = arith.constant 0 : index
    %194 = vector.load %arg21[%c0_76, %c0_77] : memref<8x32xf32, #tpu.memory_space<vmem>>, vector<8x32xf32>
    tpu.vector_store %arg21[%c0_76, %c0_77], %193 {strides = array<i32>} : memref<8x32xf32, #tpu.memory_space<vmem>>, vector<8x32xf32>,
    return
  }
  func.func @transform_0(%arg0: i32) -> (i32, i32) {
    %c0_i32 = arith.constant 0 : i32
    %c0_i32_0 = arith.constant 0 : i32
    return %arg0, %c0_i32 : i32, i32
  }
  func.func @transform_1(%arg0: i32) -> (i32, i32) {
    %c0_i32 = arith.constant 0 : i32
    %c0_i32_0 = arith.constant 0 : i32
    return %arg0, %c0_i32 : i32, i32
  }
  func.func @transform_2(%arg0: i32) -> (i32, i32, i32) {
    %c0_i32 = arith.constant 0 : i32
    %c0_i32_0 = arith.constant 0 : i32
    %c0_i32_1 = arith.constant 0 : i32
    return %arg0, %c0_i32, %c0_i32_0 : i32, i32, i32
  }
  func.func @transform_3(%arg0: i32) -> (i32, i32) {
    %c0_i32 = arith.constant 0 : i32
    %c0_i32_0 = arith.constant 0 : i32
    %c0_i32_1 = arith.constant 0 : i32
    return %c0_i32, %c0_i32_0 : i32, i32
  }
  func.func @transform_4(%arg0: i32) -> (i32, i32) {
    %c0_i32 = arith.constant 0 : i32
    %c0_i32_0 = arith.constant 0 : i32
    %c0_i32_1 = arith.constant 0 : i32
    return %c0_i32, %c0_i32_0 : i32, i32
  }
  func.func @transform_5(%arg0: i32) -> (i32, i32) {
    %c0_i32 = arith.constant 0 : i32
    %c0_i32_0 = arith.constant 0 : i32
    %c0_i32_1 = arith.constant 0 : i32
    return %c0_i32, %c0_i32_0 : i32, i32
  }
  func.func @transform_6(%arg0: i32) -> (i32, i32) {
    %c0_i32 = arith.constant 0 : i32
    %c0_i32_0 = arith.constant 0 : i32
    %c0_i32_1 = arith.constant 0 : i32
    return %c0_i32, %c0_i32_0 : i32, i32
  }
  func.func @transform_7(%arg0: i32) -> (i32, i32) {
    %c0_i32 = arith.constant 0 : i32
    %c0_i32_0 = arith.constant 0 : i32
    %c0_i32_1 = arith.constant 0 : i32
    return %c0_i32, %c0_i32_0 : i32, i32
  }
  func.func @transform_8(%arg0: i32) -> (i32, i32) {
    %c0_i32 = arith.constant 0 : i32
    %c0_i32_0 = arith.constant 0 : i32
    %c0_i32_1 = arith.constant 0 : i32
    return %c0_i32, %c0_i32_0 : i32, i32
  }
  func.func @transform_9(%arg0: i32) -> (i32, i32) {
    %c0_i32 = arith.constant 0 : i32
    %c0_i32_0 = arith.constant 0 : i32
    %c0_i32_1 = arith.constant 0 : i32
    return %c0_i32, %c0_i32_0 : i32, i32
  }
  func.func @transform_10(%arg0: i32) -> (i32, i32) {
    %c0_i32 = arith.constant 0 : i32
    %c0_i32_0 = arith.constant 0 : i32
    %c0_i32_1 = arith.constant 0 : i32
    return %c0_i32, %c0_i32_0 : i32, i32
  }
  func.func @transform_11(%arg0: i32) -> (i32, i32) {
    %c0_i32 = arith.constant 0 : i32
    %c0_i32_0 = arith.constant 0 : i32
    %c0_i32_1 = arith.constant 0 : i32
    return %c0_i32, %c0_i32_0 : i32, i32
  }
  func.func @transform_12(%arg0: i32) -> (i32, i32) {
    %c0_i32 = arith.constant 0 : i32
    %c0_i32_0 = arith.constant 0 : i32
    %c0_i32_1 = arith.constant 0 : i32
    return %c0_i32, %c0_i32_0 : i32, i32
  }
  func.func @transform_13(%arg0: i32) -> (i32, i32) {
    %c0_i32 = arith.constant 0 : i32
    %c0_i32_0 = arith.constant 0 : i32
    %c0_i32_1 = arith.constant 0 : i32
    return %c0_i32, %c0_i32_0 : i32, i32
  }
  func.func @transform_14(%arg0: i32) -> (i32, i32) {
    %c0_i32 = arith.constant 0 : i32
    %c0_i32_0 = arith.constant 0 : i32
    %c0_i32_1 = arith.constant 0 : i32
    return %c0_i32, %c0_i32_0 : i32, i32
  }
  func.func @transform_15(%arg0: i32) -> (i32, i32) {
    %c0_i32 = arith.constant 0 : i32
    %c0_i32_0 = arith.constant 0 : i32
    %c0_i32_1 = arith.constant 0 : i32
    return %c0_i32, %c0_i32_0 : i32, i32
  }
  func.func @transform_16(%arg0: i32) -> (i32, i32) {
    %c0_i32 = arith.constant 0 : i32
    %c0_i32_0 = arith.constant 0 : i32
    %c0_i32_1 = arith.constant 0 : i32
    return %c0_i32, %c0_i32_0 : i32, i32
  }
  func.func @transform_17(%arg0: i32) -> (i32, i32) {
    %c0_i32 = arith.constant 0 : i32
    %c0_i32_0 = arith.constant 0 : i32
    %c0_i32_1 = arith.constant 0 : i32
    return %c0_i32, %c0_i32_0 : i32, i32
  }
  func.func @transform_18(%arg0: i32) -> (i32, i32) {
    %c0_i32 = arith.constant 0 : i32
    %c0_i32_0 = arith.constant 0 : i32
    %c0_i32_1 = arith.constant 0 : i32
    return %c0_i32, %c0_i32_0 : i32, i32
  }
  func.func @transform_19(%arg0: i32) -> (i32, i32) {
    %c0_i32 = arith.constant 0 : i32
    %c0_i32_0 = arith.constant 0 : i32
    %c0_i32_1 = arith.constant 0 : i32
    return %c0_i32, %c0_i32_0 : i32, i32
  }
  func.func @transform_20(%arg0: i32) -> (i32, i32) {
    %c0_i32 = arith.constant 0 : i32
    %c0_i32_0 = arith.constant 0 : i32
    return %arg0, %c0_i32 : i32, i32
  }
}

</mosaic_0001>

<llo_original>
// kernel: encoder_forward.1
$region0: #{encoder_forward.1}
  #allocation0 [shape = 'u32[]', space=smem, size = 0x4, offset = 0x4, fixed_abs, tag = 'smem constant byte address 0x4 - core index']
  #allocation1 [shape = 'u32[72,128]{1,0:T(1,128)}', space=vmem, size = 0x9000, scoped, tag = 'internal scratch']
  %s0 = inlined_call_operand.vmem [shape: s32[16,1], index: 0, kind: input, shape index: {}]
  %s1 = inlined_call_operand.vmem [shape: s32[16,1], index: 1, kind: input, shape index: {}]
  %s2 = inlined_call_operand.vmem [shape: s32[2,1,8], index: 2, kind: input, shape index: {}]
  %s3 = inlined_call_operand.vmem [shape: f32[64,32], index: 3, kind: input, shape index: {}]
  %s4 = inlined_call_operand.vmem [shape: f32[8,32], index: 4, kind: input, shape index: {}]
  %s5 = inlined_call_operand.vmem [shape: f32[2,32], index: 5, kind: input, shape index: {}]
  %s6 = inlined_call_operand.vmem [shape: f32[1,32], index: 6, kind: input, shape index: {}]
  %s7 = inlined_call_operand.vmem [shape: f32[1,32], index: 7, kind: input, shape index: {}]
  %s8 = inlined_call_operand.vmem [shape: f32[32,96], index: 8, kind: input, shape index: {}]
  %s9 = inlined_call_operand.vmem [shape: f32[1,96], index: 9, kind: input, shape index: {}]
  %s10 = inlined_call_operand.vmem [shape: f32[32,32], index: 10, kind: input, shape index: {}]
  %s11 = inlined_call_operand.vmem [shape: f32[1,32], index: 11, kind: input, shape index: {}]
  %s12 = inlined_call_operand.vmem [shape: f32[1,32], index: 12, kind: input, shape index: {}]
  %s13 = inlined_call_operand.vmem [shape: f32[1,32], index: 13, kind: input, shape index: {}]
  %s14 = inlined_call_operand.vmem [shape: f32[32,64], index: 14, kind: input, shape index: {}]
  %s15 = inlined_call_operand.vmem [shape: f32[1,64], index: 15, kind: input, shape index: {}]
  %s16 = inlined_call_operand.vmem [shape: f32[64,32], index: 16, kind: input, shape index: {}]
  %s17 = inlined_call_operand.vmem [shape: f32[1,32], index: 17, kind: input, shape index: {}]
  %s18 = inlined_call_operand.vmem [shape: f32[1,32], index: 18, kind: input, shape index: {}]
  %s19 = inlined_call_operand.vmem [shape: f32[1,32], index: 19, kind: input, shape index: {}]
  %s20 = inlined_call_operand.vmem [shape: f32[16,32], index: 20, kind: output, shape index: {}]
  %s21 = sld [smem:[#allocation0]]
  $region113: #{encoder_forward.1} parent=0
    _
  %s23 = ssub.s32 1, %s21
  %s24 = scalar_select 0, %s23, %s21
  loop: start=0, step=1, limit=4
  $region2: #{encoder_forward.1} parent=0 // loop_pre_header
    _
  $region3: #{encoder_forward.1} parent=0 // loop_header
    %s26 = sphi 0, %s30
    %p27 = scmp.ge.s32.totalorder %s26, 4
    %s36 = sphi 0, %s38
    %s39 = sphi 0, %s36
    %s40 = sphi 0, %s39
    %s56 = sphi 0, %s40
    %s62 = sphi 0, %s64
    %s65 = sphi 0, %s62
    %s66 = sphi 0, %s65
    %s82 = sphi 0, %s66
    %s88 = sphi 0, %s90
    %s91 = sphi 0, %s88
    %s92 = sphi 0, %s91
    %s108 = sphi 0, %s92
    %s112 = sphi 0, %s112
    %s114 = sphi 0, %s112
    %s115 = sphi 0, %s114
    %s129 = sphi 0, %s115
    %s133 = sphi 0, %s133
    %s135 = sphi 0, %s133
    %s136 = sphi 0, %s135
    %s150 = sphi 0, %s136
    %s154 = sphi 0, %s154
    %s156 = sphi 0, %s154
    %s157 = sphi 0, %s156
    %s171 = sphi 0, %s157
    %s175 = sphi 0, %s175
    %s177 = sphi 0, %s175
    %s178 = sphi 0, %s177
    %s192 = sphi 0, %s178
    %s196 = sphi 0, %s196
    %s198 = sphi 0, %s196
    %s199 = sphi 0, %s198
    %s213 = sphi 0, %s199
    %s217 = sphi 0, %s217
    %s219 = sphi 0, %s217
    %s220 = sphi 0, %s219
    %s234 = sphi 0, %s220
    %s238 = sphi 0, %s238
    %s240 = sphi 0, %s238
    %s241 = sphi 0, %s240
    %s255 = sphi 0, %s241
    %s259 = sphi 0, %s259
    %s261 = sphi 0, %s259
    %s262 = sphi 0, %s261
    %s276 = sphi 0, %s262
    %s280 = sphi 0, %s280
    %s282 = sphi 0, %s280
    %s283 = sphi 0, %s282
    %s297 = sphi 0, %s283
    %s301 = sphi 0, %s301
    %s303 = sphi 0, %s301
    %s304 = sphi 0, %s303
    %s318 = sphi 0, %s304
    %s322 = sphi 0, %s322
    %s324 = sphi 0, %s322
    %s325 = sphi 0, %s324
    %s339 = sphi 0, %s325
    %s343 = sphi 0, %s343
    %s345 = sphi 0, %s343
    %s346 = sphi 0, %s345
    %s360 = sphi 0, %s346
    %s364 = sphi 0, %s364
    %s366 = sphi 0, %s364
    %s367 = sphi 0, %s366
    %s381 = sphi 0, %s367
    %s385 = sphi 0, %s385
    %s387 = sphi 0, %s385
    %s388 = sphi 0, %s387
    %s402 = sphi 0, %s388
    %s406 = sphi 0, %s406
    %s408 = sphi 0, %s406
    %s409 = sphi 0, %s408
    %s423 = sphi 0, %s409
    %s427 = sphi 0, %s427
    %s429 = sphi 0, %s427
    %s430 = sphi 0, %s429
    %s444 = sphi 0, %s430
    %s448 = sphi 0, %s448
    %s450 = sphi 0, %s448
    %s451 = sphi 0, %s450
    %s465 = sphi 0, %s451
    %s471 = sphi 0, %s473
    %s474 = sphi 0, %s471
    %s475 = sphi 0, %s474
    %s491 = sphi 0, %s475
  $region4: #{encoder_forward.1} parent=0 // loop_header_branch
    %29 = sbr.rel (%p27) target = $region8
  $region5: #{encoder_forward.1} parent=0 // loop_body
    %s31 = ssub.s32 %s26, 1
    %s32 = ssub.s32 %s26, 2
    %s33 = sadd.s32 %s26, 1
    %s34 = ssub.s32 %s26, %s33
    %p35 = scmp.eq.s32.totalorder %s34, 0
    %s37 = sadd.s32 %s36, 1
    %s38 = scalar_select %p35, %s36, %s37
    %p41 = pneg %p35
    %p42 = scmp.eq.s32.totalorder %s26, 1
    %p43 = por %p41, %p42
    %p44 = scmp.ne.s32.totalorder %s36, %s39
    %p45 = scmp.eq.s32.totalorder %s26, 0
    %p46 = por %p44, %p45
    %p47 = scmp.ne.s32.totalorder %s36, %s39
    %p48 = scmp.eq.s32.totalorder %s31, 1
    %p49 = por %p47, %p48
    %p50 = scmp.ne.s32.totalorder %s39, %s40
    %p51 = scmp.eq.s32.totalorder %s31, 0
    %p52 = por %p50, %p51
    %p53 = scmp.ne.s32.totalorder %s39, %s40
    %p54 = scmp.eq.s32.totalorder %s32, 1
    %p55 = por %p53, %p54
    %p57 = scmp.ne.s32.totalorder %s40, %s56
    %p58 = scmp.eq.s32.totalorder %s32, 0
    %p59 = por %p57, %p58
    %s60 = ssub.s32 %s26, %s33
    %p61 = scmp.eq.s32.totalorder %s60, 0
    %s63 = sadd.s32 %s62, 1
    %s64 = scalar_select %p61, %s62, %s63
    %p67 = pneg %p61
    %p68 = scmp.eq.s32.totalorder %s26, 1
    %p69 = por %p67, %p68
    %p70 = scmp.ne.s32.totalorder %s62, %s65
    %p71 = scmp.eq.s32.totalorder %s26, 0
    %p72 = por %p70, %p71
    %p73 = scmp.ne.s32.totalorder %s62, %s65
    %p74 = scmp.eq.s32.totalorder %s31, 1
    %p75 = por %p73, %p74
    %p76 = scmp.ne.s32.totalorder %s65, %s66
    %p77 = scmp.eq.s32.totalorder %s31, 0
    %p78 = por %p76, %p77
    %p79 = scmp.ne.s32.totalorder %s65, %s66
    %p80 = scmp.eq.s32.totalorder %s32, 1
    %p81 = por %p79, %p80
    %p83 = scmp.ne.s32.totalorder %s66, %s82
    %p84 = scmp.eq.s32.totalorder %s32, 0
    %p85 = por %p83, %p84
    %s86 = ssub.s32 %s26, %s33
    %p87 = scmp.eq.s32.totalorder %s86, 0
    %s89 = sadd.s32 %s88, 1
    %s90 = scalar_select %p87, %s88, %s89
    %p93 = pneg %p87
    %p94 = scmp.eq.s32.totalorder %s26, 1
    %p95 = por %p93, %p94
    %p96 = scmp.ne.s32.totalorder %s88, %s91
    %p97 = scmp.eq.s32.totalorder %s26, 0
    %p98 = por %p96, %p97
    %p99 = scmp.ne.s32.totalorder %s88, %s91
    %p100 = scmp.eq.s32.totalorder %s31, 1
    %p101 = por %p99, %p100
    %p102 = scmp.ne.s32.totalorder %s91, %s92
    %p103 = scmp.eq.s32.totalorder %s31, 0
    %p104 = por %p102, %p103
    %p105 = scmp.ne.s32.totalorder %s91, %s92
    %p106 = scmp.eq.s32.totalorder %s32, 1
    %p107 = por %p105, %p106
    %p109 = scmp.ne.s32.totalorder %s92, %s108
    %p110 = scmp.eq.s32.totalorder %s32, 0
    %p111 = por %p109, %p110
    %s113 = sadd.s32 %s112, 1
    %p116 = scmp.eq.s32.totalorder %s26, 1
    %p117 = scmp.ne.s32.totalorder %s112, %s114
    %p118 = scmp.eq.s32.totalorder %s26, 0
    %p119 = por %p117, %p118
    %p120 = scmp.ne.s32.totalorder %s112, %s114
    %p121 = scmp.eq.s32.totalorder %s31, 1
    %p122 = por %p120, %p121
    %p123 = scmp.ne.s32.totalorder %s114, %s115
    %p124 = scmp.eq.s32.totalorder %s31, 0
    %p125 = por %p123, %p124
    %p126 = scmp.ne.s32.totalorder %s114, %s115
    %p127 = scmp.eq.s32.totalorder %s32, 1
    %p128 = por %p126, %p127
    %p130 = scmp.ne.s32.totalorder %s115, %s129
    %p131 = scmp.eq.s32.totalorder %s32, 0
    %p132 = por %p130, %p131
    %s134 = sadd.s32 %s133, 1
    %p137 = scmp.eq.s32.totalorder %s26, 1
    %p138 = scmp.ne.s32.totalorder %s133, %s135
    %p139 = scmp.eq.s32.totalorder %s26, 0
    %p140 = por %p138, %p139
    %p141 = scmp.ne.s32.totalorder %s133, %s135
    %p142 = scmp.eq.s32.totalorder %s31, 1
    %p143 = por %p141, %p142
    %p144 = scmp.ne.s32.totalorder %s135, %s136
    %p145 = scmp.eq.s32.totalorder %s31, 0
    %p146 = por %p144, %p145
    %p147 = scmp.ne.s32.totalorder %s135, %s136
    %p148 = scmp.eq.s32.totalorder %s32, 1
    %p149 = por %p147, %p148
    %p151 = scmp.ne.s32.totalorder %s136, %s150
    %p152 = scmp.eq.s32.totalorder %s32, 0
    %p153 = por %p151, %p152
    %s155 = sadd.s32 %s154, 1
    %p158 = scmp.eq.s32.totalorder %s26, 1
    %p159 = scmp.ne.s32.totalorder %s154, %s156
    %p160 = scmp.eq.s32.totalorder %s26, 0
    %p161 = por %p159, %p160
    %p162 = scmp.ne.s32.totalorder %s154, %s156
    %p163 = scmp.eq.s32.totalorder %s31, 1
    %p164 = por %p162, %p163
    %p165 = scmp.ne.s32.totalorder %s156, %s157
    %p166 = scmp.eq.s32.totalorder %s31, 0
    %p167 = por %p165, %p166
    %p168 = scmp.ne.s32.totalorder %s156, %s157
    %p169 = scmp.eq.s32.totalorder %s32, 1
    %p170 = por %p168, %p169
    %p172 = scmp.ne.s32.totalorder %s157, %s171
    %p173 = scmp.eq.s32.totalorder %s32, 0
    %p174 = por %p172, %p173
    %s176 = sadd.s32 %s175, 1
    %p179 = scmp.eq.s32.totalorder %s26, 1
    %p180 = scmp.ne.s32.totalorder %s175, %s177
    %p181 = scmp.eq.s32.totalorder %s26, 0
    %p182 = por %p180, %p181
    %p183 = scmp.ne.s32.totalorder %s175, %s177
    %p184 = scmp.eq.s32.totalorder %s31, 1
    %p185 = por %p183, %p184
    %p186 = scmp.ne.s32.totalorder %s177, %s178
    %p187 = scmp.eq.s32.totalorder %s31, 0
    %p188 = por %p186, %p187
    %p189 = scmp.ne.s32.totalorder %s177, %s178
    %p190 = scmp.eq.s32.totalorder %s32, 1
    %p191 = por %p189, %p190
    %p193 = scmp.ne.s32.totalorder %s178, %s192
    %p194 = scmp.eq.s32.totalorder %s32, 0
    %p195 = por %p193, %p194
    %s197 = sadd.s32 %s196, 1
    %p200 = scmp.eq.s32.totalorder %s26, 1
    %p201 = scmp.ne.s32.totalorder %s196, %s198
    %p202 = scmp.eq.s32.totalorder %s26, 0
    %p203 = por %p201, %p202
    %p204 = scmp.ne.s32.totalorder %s196, %s198
    %p205 = scmp.eq.s32.totalorder %s31, 1
    %p206 = por %p204, %p205
    %p207 = scmp.ne.s32.totalorder %s198, %s199
    %p208 = scmp.eq.s32.totalorder %s31, 0
    %p209 = por %p207, %p208
    %p210 = scmp.ne.s32.totalorder %s198, %s199
    %p211 = scmp.eq.s32.totalorder %s32, 1
    %p212 = por %p210, %p211
    %p214 = scmp.ne.s32.totalorder %s199, %s213
    %p215 = scmp.eq.s32.totalorder %s32, 0
    %p216 = por %p214, %p215
    %s218 = sadd.s32 %s217, 1
    %p221 = scmp.eq.s32.totalorder %s26, 1
    %p222 = scmp.ne.s32.totalorder %s217, %s219
    %p223 = scmp.eq.s32.totalorder %s26, 0
    %p224 = por %p222, %p223
    %p225 = scmp.ne.s32.totalorder %s217, %s219
    %p226 = scmp.eq.s32.totalorder %s31, 1
    %p227 = por %p225, %p226
    %p228 = scmp.ne.s32.totalorder %s219, %s220
    %p229 = scmp.eq.s32.totalorder %s31, 0
    %p230 = por %p228, %p229
    %p231 = scmp.ne.s32.totalorder %s219, %s220
    %p232 = scmp.eq.s32.totalorder %s32, 1
    %p233 = por %p231, %p232
    %p235 = scmp.ne.s32.totalorder %s220, %s234
    %p236 = scmp.eq.s32.totalorder %s32, 0
    %p237 = por %p235, %p236
    %s239 = sadd.s32 %s238, 1
    %p242 = scmp.eq.s32.totalorder %s26, 1
    %p243 = scmp.ne.s32.totalorder %s238, %s240
    %p244 = scmp.eq.s32.totalorder %s26, 0
    %p245 = por %p243, %p244
    %p246 = scmp.ne.s32.totalorder %s238, %s240
    %p247 = scmp.eq.s32.totalorder %s31, 1
    %p248 = por %p246, %p247
    %p249 = scmp.ne.s32.totalorder %s240, %s241
    %p250 = scmp.eq.s32.totalorder %s31, 0
    %p251 = por %p249, %p250
    %p252 = scmp.ne.s32.totalorder %s240, %s241
    %p253 = scmp.eq.s32.totalorder %s32, 1
    %p254 = por %p252, %p253
    %p256 = scmp.ne.s32.totalorder %s241, %s255
    %p257 = scmp.eq.s32.totalorder %s32, 0
    %p258 = por %p256, %p257
    %s260 = sadd.s32 %s259, 1
    %p263 = scmp.eq.s32.totalorder %s26, 1
    %p264 = scmp.ne.s32.totalorder %s259, %s261
    %p265 = scmp.eq.s32.totalorder %s26, 0
    %p266 = por %p264, %p265
    %p267 = scmp.ne.s32.totalorder %s259, %s261
    %p268 = scmp.eq.s32.totalorder %s31, 1
    %p269 = por %p267, %p268
    %p270 = scmp.ne.s32.totalorder %s261, %s262
    %p271 = scmp.eq.s32.totalorder %s31, 0
    %p272 = por %p270, %p271
    %p273 = scmp.ne.s32.totalorder %s261, %s262
    %p274 = scmp.eq.s32.totalorder %s32, 1
    %p275 = por %p273, %p274
    %p277 = scmp.ne.s32.totalorder %s262, %s276
    %p278 = scmp.eq.s32.totalorder %s32, 0
    %p279 = por %p277, %p278
    %s281 = sadd.s32 %s280, 1
    %p284 = scmp.eq.s32.totalorder %s26, 1
    %p285 = scmp.ne.s32.totalorder %s280, %s282
    %p286 = scmp.eq.s32.totalorder %s26, 0
    %p287 = por %p285, %p286
    %p288 = scmp.ne.s32.totalorder %s280, %s282
    %p289 = scmp.eq.s32.totalorder %s31, 1
    %p290 = por %p288, %p289
    %p291 = scmp.ne.s32.totalorder %s282, %s283
    %p292 = scmp.eq.s32.totalorder %s31, 0
    %p293 = por %p291, %p292
    %p294 = scmp.ne.s32.totalorder %s282, %s283
    %p295 = scmp.eq.s32.totalorder %s32, 1
    %p296 = por %p294, %p295
    %p298 = scmp.ne.s32.totalorder %s283, %s297
    %p299 = scmp.eq.s32.totalorder %s32, 0
    %p300 = por %p298, %p299
    %s302 = sadd.s32 %s301, 1
    %p305 = scmp.eq.s32.totalorder %s26, 1
    %p306 = scmp.ne.s32.totalorder %s301, %s303
    %p307 = scmp.eq.s32.totalorder %s26, 0
    %p308 = por %p306, %p307
    %p309 = scmp.ne.s32.totalorder %s301, %s303
    %p310 = scmp.eq.s32.totalorder %s31, 1
    %p311 = por %p309, %p310
    %p312 = scmp.ne.s32.totalorder %s303, %s304
    %p313 = scmp.eq.s32.totalorder %s31, 0
    %p314 = por %p312, %p313
    %p315 = scmp.ne.s32.totalorder %s303, %s304
    %p316 = scmp.eq.s32.totalorder %s32, 1
    %p317 = por %p315, %p316
    %p319 = scmp.ne.s32.totalorder %s304, %s318
    %p320 = scmp.eq.s32.totalorder %s32, 0
    %p321 = por %p319, %p320
    %s323 = sadd.s32 %s322, 1
    %p326 = scmp.eq.s32.totalorder %s26, 1
    %p327 = scmp.ne.s32.totalorder %s322, %s324
    %p328 = scmp.eq.s32.totalorder %s26, 0
    %p329 = por %p327, %p328
    %p330 = scmp.ne.s32.totalorder %s322, %s324
    %p331 = scmp.eq.s32.totalorder %s31, 1
    %p332 = por %p330, %p331
    %p333 = scmp.ne.s32.totalorder %s324, %s325
    %p334 = scmp.eq.s32.totalorder %s31, 0
    %p335 = por %p333, %p334
    %p336 = scmp.ne.s32.totalorder %s324, %s325
    %p337 = scmp.eq.s32.totalorder %s32, 1
    %p338 = por %p336, %p337
    %p340 = scmp.ne.s32.totalorder %s325, %s339
    %p341 = scmp.eq.s32.totalorder %s32, 0
    %p342 = por %p340, %p341
    %s344 = sadd.s32 %s343, 1
    %p347 = scmp.eq.s32.totalorder %s26, 1
    %p348 = scmp.ne.s32.totalorder %s343, %s345
    %p349 = scmp.eq.s32.totalorder %s26, 0
    %p350 = por %p348, %p349
    %p351 = scmp.ne.s32.totalorder %s343, %s345
    %p352 = scmp.eq.s32.totalorder %s31, 1
    %p353 = por %p351, %p352
    %p354 = scmp.ne.s32.totalorder %s345, %s346
    %p355 = scmp.eq.s32.totalorder %s31, 0
    %p356 = por %p354, %p355
    %p357 = scmp.ne.s32.totalorder %s345, %s346
    %p358 = scmp.eq.s32.totalorder %s32, 1
    %p359 = por %p357, %p358
    %p361 = scmp.ne.s32.totalorder %s346, %s360
    %p362 = scmp.eq.s32.totalorder %s32, 0
    %p363 = por %p361, %p362
    %s365 = sadd.s32 %s364, 1
    %p368 = scmp.eq.s32.totalorder %s26, 1
    %p369 = scmp.ne.s32.totalorder %s364, %s366
    %p370 = scmp.eq.s32.totalorder %s26, 0
    %p371 = por %p369, %p370
    %p372 = scmp.ne.s32.totalorder %s364, %s366
    %p373 = scmp.eq.s32.totalorder %s31, 1
    %p374 = por %p372, %p373
    %p375 = scmp.ne.s32.totalorder %s366, %s367
    %p376 = scmp.eq.s32.totalorder %s31, 0
    %p377 = por %p375, %p376
    %p378 = scmp.ne.s32.totalorder %s366, %s367
    %p379 = scmp.eq.s32.totalorder %s32, 1
    %p380 = por %p378, %p379
    %p382 = scmp.ne.s32.totalorder %s367, %s381
    %p383 = scmp.eq.s32.totalorder %s32, 0
    %p384 = por %p382, %p383
    %s386 = sadd.s32 %s385, 1
    %p389 = scmp.eq.s32.totalorder %s26, 1
    %p390 = scmp.ne.s32.totalorder %s385, %s387
    %p391 = scmp.eq.s32.totalorder %s26, 0
    %p392 = por %p390, %p391
    %p393 = scmp.ne.s32.totalorder %s385, %s387
    %p394 = scmp.eq.s32.totalorder %s31, 1
    %p395 = por %p393, %p394
    %p396 = scmp.ne.s32.totalorder %s387, %s388
    %p397 = scmp.eq.s32.totalorder %s31, 0
    %p398 = por %p396, %p397
    %p399 = scmp.ne.s32.totalorder %s387, %s388
    %p400 = scmp.eq.s32.totalorder %s32, 1
    %p401 = por %p399, %p400
    %p403 = scmp.ne.s32.totalorder %s388, %s402
    %p404 = scmp.eq.s32.totalorder %s32, 0
    %p405 = por %p403, %p404
    %s407 = sadd.s32 %s406, 1
    %p410 = scmp.eq.s32.totalorder %s26, 1
    %p411 = scmp.ne.s32.totalorder %s406, %s408
    %p412 = scmp.eq.s32.totalorder %s26, 0
    %p413 = por %p411, %p412
    %p414 = scmp.ne.s32.totalorder %s406, %s408
    %p415 = scmp.eq.s32.totalorder %s31, 1
    %p416 = por %p414, %p415
    %p417 = scmp.ne.s32.totalorder %s408, %s409
    %p418 = scmp.eq.s32.totalorder %s31, 0
    %p419 = por %p417, %p418
    %p420 = scmp.ne.s32.totalorder %s408, %s409
    %p421 = scmp.eq.s32.totalorder %s32, 1
    %p422 = por %p420, %p421
    %p424 = scmp.ne.s32.totalorder %s409, %s423
    %p425 = scmp.eq.s32.totalorder %s32, 0
    %p426 = por %p424, %p425
    %s428 = sadd.s32 %s427, 1
    %p431 = scmp.eq.s32.totalorder %s26, 1
    %p432 = scmp.ne.s32.totalorder %s427, %s429
    %p433 = scmp.eq.s32.totalorder %s26, 0
    %p434 = por %p432, %p433
    %p435 = scmp.ne.s32.totalorder %s427, %s429
    %p436 = scmp.eq.s32.totalorder %s31, 1
    %p437 = por %p435, %p436
    %p438 = scmp.ne.s32.totalorder %s429, %s430
    %p439 = scmp.eq.s32.totalorder %s31, 0
    %p440 = por %p438, %p439
    %p441 = scmp.ne.s32.totalorder %s429, %s430
    %p442 = scmp.eq.s32.totalorder %s32, 1
    %p443 = por %p441, %p442
    %p445 = scmp.ne.s32.totalorder %s430, %s444
    %p446 = scmp.eq.s32.totalorder %s32, 0
    %p447 = por %p445, %p446
    %s449 = sadd.s32 %s448, 1
    %p452 = scmp.eq.s32.totalorder %s26, 1
    %p453 = scmp.ne.s32.totalorder %s448, %s450
    %p454 = scmp.eq.s32.totalorder %s26, 0
    %p455 = por %p453, %p454
    %p456 = scmp.ne.s32.totalorder %s448, %s450
    %p457 = scmp.eq.s32.totalorder %s31, 1
    %p458 = por %p456, %p457
    %p459 = scmp.ne.s32.totalorder %s450, %s451
    %p460 = scmp.eq.s32.totalorder %s31, 0
    %p461 = por %p459, %p460
    %p462 = scmp.ne.s32.totalorder %s450, %s451
    %p463 = scmp.eq.s32.totalorder %s32, 1
    %p464 = por %p462, %p463
    %p466 = scmp.ne.s32.totalorder %s451, %s465
    %p467 = scmp.eq.s32.totalorder %s32, 0
    %p468 = por %p466, %p467
    %s469 = ssub.s32 %s26, %s33
    %p470 = scmp.eq.s32.totalorder %s469, 0
    %s472 = sadd.s32 %s471, 1
    %s473 = scalar_select %p470, %s471, %s472
    %p476 = pneg %p470
    %p477 = scmp.eq.s32.totalorder %s26, 1
    %p478 = por %p476, %p477
    %p479 = scmp.ne.s32.totalorder %s471, %s474
    %p480 = scmp.eq.s32.totalorder %s26, 0
    %p481 = por %p479, %p480
    %p482 = scmp.ne.s32.totalorder %s471, %s474
    %p483 = scmp.eq.s32.totalorder %s31, 1
    %p484 = por %p482, %p483
    %p485 = scmp.ne.s32.totalorder %s474, %s475
    %p486 = scmp.eq.s32.totalorder %s31, 0
    %p487 = por %p485, %p486
    %p488 = scmp.ne.s32.totalorder %s474, %s475
    %p489 = scmp.eq.s32.totalorder %s32, 1
    %p490 = por %p488, %p489
    %p492 = scmp.ne.s32.totalorder %s475, %s491
    %p493 = scmp.eq.s32.totalorder %s32, 0
    %p494 = por %p492, %p493
    %p495 = scmp.le.s32.totalorder 1, %s26
    %p496 = scmp.lt.s32.totalorder %s26, 3
    %p497 = pnand %p495, %p496
    %p498 = pneg %p497
    // Predicated region
    $region9: #{encoder_forward.1} parent=5 // pred_check
      _
    $region10: #{encoder_forward.1} parent=5 // pred_check_branch
      %500 = sbr.rel (%p497) target = $region12
    $region11: #{encoder_forward.1} parent=5 // pred_region
      %s501 = ssub.s32 %s26, 1
      // Predicated region
      $region13: #{encoder_forward.1} parent=11 // pred_check
        %p502 = pneg %p125
      $region14: #{encoder_forward.1} parent=11 // pred_check_branch
        %504 = sbr.rel (%p502) target = $region16
      $region15: #{encoder_forward.1} parent=11 // pred_region
        _
      $region16: #{encoder_forward.1} parent=11 // pred_fallthru
        _
      // Predicated region
      $region17: #{encoder_forward.1} parent=11 // pred_check
        %p505 = pneg %p146
      $region18: #{encoder_forward.1} parent=11 // pred_check_branch
        %507 = sbr.rel (%p505) target = $region20
      $region19: #{encoder_forward.1} parent=11 // pred_region
        _
      $region20: #{encoder_forward.1} parent=11 // pred_fallthru
        _
      // Predicated region
      $region21: #{encoder_forward.1} parent=11 // pred_check
        %p508 = pneg %p167
      $region22: #{encoder_forward.1} parent=11 // pred_check_branch
        %510 = sbr.rel (%p508) target = $region24
      $region23: #{encoder_forward.1} parent=11 // pred_region
        _
      $region24: #{encoder_forward.1} parent=11 // pred_fallthru
        _
      // Predicated region
      $region25: #{encoder_forward.1} parent=11 // pred_check
        %p511 = pneg %p188
      $region26: #{encoder_forward.1} parent=11 // pred_check_branch
        %513 = sbr.rel (%p511) target = $region28
      $region27: #{encoder_forward.1} parent=11 // pred_region
        _
      $region28: #{encoder_forward.1} parent=11 // pred_fallthru
        _
      // Predicated region
      $region29: #{encoder_forward.1} parent=11 // pred_check
        %p514 = pneg %p209
      $region30: #{encoder_forward.1} parent=11 // pred_check_branch
        %516 = sbr.rel (%p514) target = $region32
      $region31: #{encoder_forward.1} parent=11 // pred_region
        _
      $region32: #{encoder_forward.1} parent=11 // pred_fallthru
        _
      // Predicated region
      $region33: #{encoder_forward.1} parent=11 // pred_check
        %p517 = pneg %p230
      $region34: #{encoder_forward.1} parent=11 // pred_check_branch
        %519 = sbr.rel (%p517) target = $region36
      $region35: #{encoder_forward.1} parent=11 // pred_region
        _
      $region36: #{encoder_forward.1} parent=11 // pred_fallthru
        _
      // Predicated region
      $region37: #{encoder_forward.1} parent=11 // pred_check
        %p520 = pneg %p251
      $region38: #{encoder_forward.1} parent=11 // pred_check_branch
        %522 = sbr.rel (%p520) target = $region40
      $region39: #{encoder_forward.1} parent=11 // pred_region
        _
      $region40: #{encoder_forward.1} parent=11 // pred_fallthru
        _
      // Predicated region
      $region41: #{encoder_forward.1} parent=11 // pred_check
        %p523 = pneg %p272
      $region42: #{encoder_forward.1} parent=11 // pred_check_branch
        %525 = sbr.rel (%p523) target = $region44
      $region43: #{encoder_forward.1} parent=11 // pred_region
        _
      $region44: #{encoder_forward.1} parent=11 // pred_fallthru
        _
      // Predicated region
      $region45: #{encoder_forward.1} parent=11 // pred_check
        %p526 = pneg %p293
      $region46: #{encoder_forward.1} parent=11 // pred_check_branch
        %528 = sbr.rel (%p526) target = $region48
      $region47: #{encoder_forward.1} parent=11 // pred_region
        _
      $region48: #{encoder_forward.1} parent=11 // pred_fallthru
        _
      // Predicated region
      $region49: #{encoder_forward.1} parent=11 // pred_check
        %p529 = pneg %p314
      $region50: #{encoder_forward.1} parent=11 // pred_check_branch
        %531 = sbr.rel (%p529) target = $region52
      $region51: #{encoder_forward.1} parent=11 // pred_region
        _
      $region52: #{encoder_forward.1} parent=11 // pred_fallthru
        _
      // Predicated region
      $region53: #{encoder_forward.1} parent=11 // pred_check
        %p532 = pneg %p335
      $region54: #{encoder_forward.1} parent=11 // pred_check_branch
        %534 = sbr.rel (%p532) target = $region56
      $region55: #{encoder_forward.1} parent=11 // pred_region
        _
      $region56: #{encoder_forward.1} parent=11 // pred_fallthru
        _
      // Predicated region
      $region57: #{encoder_forward.1} parent=11 // pred_check
        %p535 = pneg %p356
      $region58: #{encoder_forward.1} parent=11 // pred_check_branch
        %537 = sbr.rel (%p535) target = $region60
      $region59: #{encoder_forward.1} parent=11 // pred_region
        _
      $region60: #{encoder_forward.1} parent=11 // pred_fallthru
        _
      // Predicated region
      $region61: #{encoder_forward.1} parent=11 // pred_check
        %p538 = pneg %p377
      $region62: #{encoder_forward.1} parent=11 // pred_check_branch
        %540 = sbr.rel (%p538) target = $region64
      $region63: #{encoder_forward.1} parent=11 // pred_region
        _
      $region64: #{encoder_forward.1} parent=11 // pred_fallthru
        _
      // Predicated region
      $region65: #{encoder_forward.1} parent=11 // pred_check
        %p541 = pneg %p398
      $region66: #{encoder_forward.1} parent=11 // pred_check_branch
        %543 = sbr.rel (%p541) target = $region68
      $region67: #{encoder_forward.1} parent=11 // pred_region
        _
      $region68: #{encoder_forward.1} parent=11 // pred_fallthru
        _
      // Predicated region
      $region69: #{encoder_forward.1} parent=11 // pred_check
        %p544 = pneg %p419
      $region70: #{encoder_forward.1} parent=11 // pred_check_branch
        %546 = sbr.rel (%p544) target = $region72
      $region71: #{encoder_forward.1} parent=11 // pred_region
        _
      $region72: #{encoder_forward.1} parent=11 // pred_fallthru
        _
      // Predicated region
      $region73: #{encoder_forward.1} parent=11 // pred_check
        %p547 = pneg %p440
      $region74: #{encoder_forward.1} parent=11 // pred_check_branch
        %549 = sbr.rel (%p547) target = $region76
      $region75: #{encoder_forward.1} parent=11 // pred_region
        _
      $region76: #{encoder_forward.1} parent=11 // pred_fallthru
        _
      // Predicated region
      $region77: #{encoder_forward.1} parent=11 // pred_check
        %p550 = pneg %p461
      $region78: #{encoder_forward.1} parent=11 // pred_check_branch
        %552 = sbr.rel (%p550) target = $region80
      $region79: #{encoder_forward.1} parent=11 // pred_region
        _
      $region80: #{encoder_forward.1} parent=11 // pred_fallthru
        _
    $region12: #{encoder_forward.1} parent=5 // pred_fallthru
      _
    %p553 = scmp.lt.s32.totalorder %s26, 2
    // Predicated region
    $region81: #{encoder_forward.1} parent=5 // pred_check
      %p554 = pneg %p553
    $region82: #{encoder_forward.1} parent=5 // pred_check_branch
      %556 = sbr.rel (%p554) target = $region84
    $region83: #{encoder_forward.1} parent=5 // pred_region
      // Predicated region
      $region85: #{encoder_forward.1} parent=83 // pred_check
        %p557 = pneg %p46
      $region86: #{encoder_forward.1} parent=83 // pred_check_branch
        %559 = sbr.rel (%p557) target = $region88
      $region87: #{encoder_forward.1} parent=83 // pred_region
        %p560 = scmp.lt.s32.totalorder %s26, 1
        %s561 = scalar_select %p560, %s26, 1
        %s562 = smul.addr %s561, 8
        %s563 = scalar_lea.vmem %s0, %s562
      $region88: #{encoder_forward.1} parent=83 // pred_fallthru
        _
      // Predicated region
      $region89: #{encoder_forward.1} parent=83 // pred_check
        %p564 = pneg %p72
      $region90: #{encoder_forward.1} parent=83 // pred_check_branch
        %566 = sbr.rel (%p564) target = $region92
      $region91: #{encoder_forward.1} parent=83 // pred_region
        %p567 = scmp.lt.s32.totalorder %s26, 1
        %s568 = scalar_select %p567, %s26, 1
        %s569 = smul.addr %s568, 8
        %s570 = scalar_lea.vmem %s1, %s569
      $region92: #{encoder_forward.1} parent=83 // pred_fallthru
        _
      // Predicated region
      $region93: #{encoder_forward.1} parent=83 // pred_check
        %p571 = pneg %p98
      $region94: #{encoder_forward.1} parent=83 // pred_check_branch
        %573 = sbr.rel (%p571) target = $region96
      $region95: #{encoder_forward.1} parent=83 // pred_region
        %p574 = scmp.lt.s32.totalorder %s26, 1
        %s575 = scalar_select %p574, %s26, 1
        %s576 = scalar_lea.vmem %s2, %s575
      $region96: #{encoder_forward.1} parent=83 // pred_fallthru
        _
    $region84: #{encoder_forward.1} parent=5 // pred_fallthru
      _
    %p577 = scmp.le.s32.totalorder 1, %s26
    %p578 = scmp.lt.s32.totalorder %s26, 3
    %p579 = pnand %p577, %p578
    %p580 = pneg %p579
    // Predicated region
    $region97: #{encoder_forward.1} parent=5 // pred_check
      _
    $region98: #{encoder_forward.1} parent=5 // pred_check_branch
      %582 = sbr.rel (%p579) target = $region100
    $region99: #{encoder_forward.1} parent=5 // pred_region
      %s583 = ssub.s32 %s26, 1
      %p584 = scmp.lt.s32.totalorder %s31, 1
      %s585 = scalar_select %p584, %s31, 1
      %s586 = smul.addr %s585, 8
      %s587 = scalar_lea.vmem %s0, %s586
      %p588 = pneg %p52
      %p589 = pneg %p49
      %p590 = scmp.lt.s32.totalorder %s31, 1
      %s591 = scalar_select %p590, %s31, 1
      %s592 = smul.addr %s591, 8
      %s593 = scalar_lea.vmem %s1, %s592
      %p594 = pneg %p78
      %p595 = pneg %p75
      %p596 = scmp.lt.s32.totalorder %s31, 1
      %s597 = scalar_select %p596, %s31, 1
      %s598 = scalar_lea.vmem %s2, %s597
      %p599 = pneg %p104
      %p600 = pneg %p101
      %p601 = pneg %p125
      %p602 = pneg %p122
      %p603 = pneg %p146
      %p604 = pneg %p143
      %p605 = pneg %p167
      %p606 = pneg %p164
      %p607 = pneg %p188
      %p608 = pneg %p185
      %p609 = pneg %p209
      %p610 = pneg %p206
      %p611 = pneg %p230
      %p612 = pneg %p227
      %p613 = pneg %p251
      %p614 = pneg %p248
      %p615 = pneg %p272
      %p616 = pneg %p269
      %p617 = pneg %p293
      %p618 = pneg %p290
      %p619 = pneg %p314
      %p620 = pneg %p311
      %p621 = pneg %p335
      %p622 = pneg %p332
      %p623 = pneg %p356
      %p624 = pneg %p353
      %p625 = pneg %p377
      %p626 = pneg %p374
      %p627 = pneg %p398
      %p628 = pneg %p395
      %p629 = pneg %p419
      %p630 = pneg %p416
      %p631 = pneg %p440
      %p632 = pneg %p437
      %p633 = pneg %p461
      %p634 = pneg %p458
      %p635 = pneg %p487
      %p636 = pneg %p484
      %p637 = scmp.lt.s32.totalorder %s31, 1
      %s638 = scalar_select %p637, %s31, 1
      %s639 = smul.addr %s638, 8
      %s640 = scalar_lea.vmem %s20, %s639
      %p641 = scmp.lt.s32.totalorder %s31, 1
      %s642 = scalar_select %p641, %s31, 1
      %s643 = smul.addr %s642, 8
      %s644 = scalar_lea.vmem %s0, %s643
      %p645 = scmp.lt.s32.totalorder %s31, 1
      %s646 = scalar_select %p645, %s31, 1
      %s647 = smul.addr %s646, 8
      %s648 = scalar_lea.vmem %s1, %s647
      %p649 = scmp.lt.s32.totalorder %s31, 1
      %s650 = scalar_select %p649, %s31, 1
      %s651 = scalar_lea.vmem %s2, %s650
      %p652 = scmp.lt.s32.totalorder %s31, 1
      %s653 = scalar_select %p652, %s31, 1
      %s654 = smul.addr %s653, 8
      %s655 = scalar_lea.vmem %s20, %s654
      %v656 = vld [vmem:[%s644] sm:$0xff]
      %v657 = vld [vmem:[%s648] sm:$0xff]
      %v658 = vlaneseq
      %v659 = vand.u32 %v658, 127
      %660 = vset.pattern.permute.xlu0 0
      %661 = vperm.xlu0 %660, %v656
      %v662 = vpop.permute.xlu0 %661
      %vm663 = vcmp.eq.s32.totalorder %v662, %v659
      %v664 = vsel %vm663, 1, 0
      %v665 = vcvt.s32.f32 %v664
      %v666 = vld [vmem:[%s3] sm:$0xff]
      %v667 = vld [vmem:[%s3 + $0x8] sm:$0xff]
      %v668 = vld [vmem:[%s3 + $0x10] sm:$0xff]
      %v669 = vld [vmem:[%s3 + $0x18] sm:$0xff]
      %v670 = vld [vmem:[%s3 + $0x20] sm:$0xff]
      %v671 = vld [vmem:[%s3 + $0x28] sm:$0xff]
      %v672 = vld [vmem:[%s3 + $0x30] sm:$0xff]
      %v673 = vld [vmem:[%s3 + $0x38] sm:$0xff]
      %v674 = vld [vmem:[%s5] sm:$0x3]
      %v675 = vcvt.s32.f32 %v657
      %v676 = vperm.slane %v674, 0
      %vm677 = vcmask 523264
      %v679 = vsel %vm677, %v665, 0
      %681 = vmatpush.msra.mxu0 0.0
      %682 = vmatpush.msra.mxu0 0.0
      %683 = vmatpush.msra.mxu0 0.0
      %684 = vmatpush.msra.mxu0 0.0
      %685 = vmatpush.msra.mxu0 0.0
      %686 = vmatpush.msra.mxu0 0.0
      %687 = vmatpush.msra.mxu0 0.0
      %688 = vmatpush.msra.mxu0 0.0
      %689 = vmatpush.msra.mxu0 %v673
      %690 = vmatpush.msra.mxu0 %v672
      %691 = vmatpush.msra.mxu0 %v671
      %692 = vmatpush.msra.mxu0 %v670
      %693 = vmatpush.msra.mxu0 %v669
      %694 = vmatpush.msra.mxu0 %v668
      %695 = vmatpush.msra.mxu0 %v667
      %696 = vmatpush.msra.mxu0 %v666
      %697 = vmatmul.f32.gmra.mxu0 %v679
      %v698 = vpop.f32.mrf.mxu0
      %v699 = vadd.f32 %v676, %v698
      %700 = vdwg.mxu0
      %v702 = vrot.slane %v674, 7
      %v704 = vsub.f32 %v674, %v702
      %706 = vset.pattern.permute.xlu0 0
      %707 = vperm.xlu0 %706, %v675
      %v708 = vpop.permute.xlu0 %707
      %v710 = vperm.slane %v704, 1
      %v711 = vmul.f32 %v708, %v710
      %v712 = vadd.f32 %v699, %v711
      %v713 = vld [vmem:[%s4] sm:$0xff]
      %v714 = vadd.f32 %v712, %v713
      %v715 = vld [vmem:[%s6] sm:$0x1]
      %v716 = vld [vmem:[%s7] sm:$0x1]
      %vm717 = vcmask 261120
      %v718 = vsel %vm717, %v714, 0.0
      %719 = vadd.xlane.f32.xlu0 %v718
      %v720 = vpop.xlane.xlu0 %719
      %v721 = vrcp.pop 32.0
      %v722 = vmul.f32 32.0, %v721
      %v723 = vsub.f32 1.0, %v722
      %v724 = vmul.f32 %v721, %v723
      %v725 = vadd.f32 %v721, %v724
      %vm726 = vweird.f32 %v721
      %v727 = vsel %vm726, %v721, %v725
      %v728 = vmul.f32 %v720, %v727
      %v729 = vsub.f32 %v714, %v728
      %v730 = vmul.f32 %v729, %v729
      %v731 = vsel %vm717, %v730, 0.0
      %732 = vadd.xlane.f32.xlu0 %v731
      %v733 = vpop.xlane.xlu0 %732
      %v734 = vmul.f32 %v733, %v727
      %v735 = vadd.f32 %v734, 1e-12
      %v736 = vrsqrt.pop %v735
      %v737 = vmul.f32 %v736, %v735
      %v738 = vmul.f32 %v737, %v736
      %v739 = vmul.f32 0.5, %v738
      %v740 = vsub.f32 1.5, %v739
      %v741 = vmul.f32 %v736, %v740
      %vm742 = vweird.f32 %v735
      %vm743 = vweird.f32 %v736
      %vm744 = vmor %vm742, %vm743
      %v745 = vsel %vm744, %v736, %v741
      %v746 = vmul.f32 %v729, %v745
      %v748 = vperm.slane %v715, 0
      %v750 = vmul.f32 %v746, %v748
      %v752 = vperm.slane %v716, 0
      %v754 = vadd.f32 %v750, %v752
      %v755 = vld [vmem:[%s651] sm:$0x1]
      %v756 = vcvt.s32.f32 %v755
      %v757 = vsub.f32 1.0, %v756
      %v758 = vmul.f32 %v757, -1e+09
      %v759 = vld [vmem:[%s8] sm:$0xff]
      %v760 = vld [vmem:[%s8 + $0x8] sm:$0xff]
      %v761 = vld [vmem:[%s8 + $0x10] sm:$0xff]
      %v762 = vld [vmem:[%s8 + $0x18] sm:$0xff]
      %v763 = vld [vmem:[%s9] sm:$0x1]
      %v765 = vperm.slane %v763, 0
      %v768 = vsel %vm717, %v754, 0
      %770 = vmatpush.msra.mxu0 0.0
      %771 = vmatpush.msra.mxu0 0.0
      %772 = vmatpush.msra.mxu0 0.0
      %773 = vmatpush.msra.mxu0 0.0
      %774 = vmatpush.msra.mxu0 0.0
      %775 = vmatpush.msra.mxu0 0.0
      %776 = vmatpush.msra.mxu0 0.0
      %777 = vmatpush.msra.mxu0 0.0
      %778 = vmatpush.msra.mxu0 0.0
      %779 = vmatpush.msra.mxu0 0.0
      %780 = vmatpush.msra.mxu0 0.0
      %781 = vmatpush.msra.mxu0 0.0
      %782 = vmatpush.msra.mxu0 %v762
      %783 = vmatpush.msra.mxu0 %v761
      %784 = vmatpush.msra.mxu0 %v760
      %785 = vmatpush.msra.mxu0 %v759
      %786 = vmatmul.f32.gmra.mxu0 %v768
      %v787 = vpop.f32.mrf.mxu0
      %v788 = vadd.f32 %v765, %v787
      %789 = vdwg.mxu0
      %v790 = vld [vmem:[%s10] sm:$0xff]
      %v791 = vld [vmem:[%s10 + $0x8] sm:$0xff]
      %v792 = vld [vmem:[%s10 + $0x10] sm:$0xff]
      %v793 = vld [vmem:[%s10 + $0x18] sm:$0xff]
      %795 = vrot.lane.b32.xlu0 %v788, 96
      %v796 = vpop.permute.xlu0 %795
      %vm797 = vcmask 130048
      %v798 = vsel %vm797, %v788, 0
      %v800 = vsel %vm797, %v796, 0
      %802 = vmatpush.xpose.msra.mxu0 0.0
      %803 = vmatpush.xpose.msra.mxu0 0.0
      %804 = vmatpush.xpose.msra.mxu0 0.0
      %805 = vmatpush.xpose.msra.mxu0 0.0
      %806 = vmatpush.xpose.msra.mxu0 0.0
      %807 = vmatpush.xpose.msra.mxu0 0.0
      %808 = vmatpush.xpose.msra.mxu0 0.0
      %809 = vmatpush.xpose.msra.mxu0 0.0
      %810 = vmatpush.xpose.msra.mxu0 0.0
      %811 = vmatpush.xpose.msra.mxu0 0.0
      %812 = vmatpush.xpose.msra.mxu0 0.0
      %813 = vmatpush.xpose.msra.mxu0 0.0
      %814 = vmatpush.xpose.msra.mxu0 0.0
      %815 = vmatpush.xpose.msra.mxu0 0.0
      %816 = vmatpush.xpose.msra.mxu0 0.0
      %817 = vmatpush.xpose.msra.mxu0 %v800
      %818 = vmatmul.f32.gmra.mxu0 %v798
      %v819 = vpop.f32.mrf.mxu0
      %v820 = vadd.f32 0.0, %v819
      %821 = vdwg.mxu0
      %v822 = vmul.f32 %v820, 0.25
      %v824 = vperm.slane %v758, 0
      %v826 = vadd.f32 %v822, %v824
      %vm827 = vcmask 64512
      %v828 = vsel %vm827, %v826, -inf
      %829 = vmax.xlane.f32.xlu0 %v828
      %v830 = vpop.xlane.xlu0 %829
      %v831 = vsub.f32 %v826, %v830
      %v832 = vmul.f32 %v831, 1.442695
      %v833 = vpow.pop %v832
      %v834 = vsel %vm827, %v833, 0.0
      %835 = vadd.xlane.f32.xlu0 %v834
      %v836 = vpop.xlane.xlu0 %835
      %v837 = vrcp.pop %v836
      %v838 = vmul.f32 %v833, %v837
      %839 = vrot.lane.b32.xlu0 %v788, 64
      %v840 = vpop.permute.xlu0 %839
      %v843 = vsel %vm827, %v838, 0
      %845 = vmatpush.msra.mxu0 0.0
      %846 = vmatpush.msra.mxu0 0.0
      %847 = vmatpush.msra.mxu0 0.0
      %848 = vmatpush.msra.mxu0 0.0
      %849 = vmatpush.msra.mxu0 0.0
      %850 = vmatpush.msra.mxu0 0.0
      %851 = vmatpush.msra.mxu0 0.0
      %852 = vmatpush.msra.mxu0 0.0
      %853 = vmatpush.msra.mxu0 0.0
      %854 = vmatpush.msra.mxu0 0.0
      %855 = vmatpush.msra.mxu0 0.0
      %856 = vmatpush.msra.mxu0 0.0
      %857 = vmatpush.msra.mxu0 0.0
      %858 = vmatpush.msra.mxu0 0.0
      %859 = vmatpush.msra.mxu0 0.0
      %860 = vmatpush.msra.mxu0 %v840
      %861 = vmatmul.f32.gmra.mxu0 %v843
      %v862 = vpop.f32.mrf.mxu0
      %v863 = vadd.f32 0.0, %v862
      %864 = vdwg.mxu0
      %865 = vrot.lane.b32.xlu0 %v788, 112
      %v866 = vpop.permute.xlu0 %865
      %867 = vrot.lane.b32.xlu0 %v788, 80
      %v868 = vpop.permute.xlu0 %867
      %v869 = vsel %vm797, %v866, 0
      %v871 = vsel %vm797, %v868, 0
      %873 = vmatpush.xpose.msra.mxu0 0.0
      %874 = vmatpush.xpose.msra.mxu0 0.0
      %875 = vmatpush.xpose.msra.mxu0 0.0
      %876 = vmatpush.xpose.msra.mxu0 0.0
      %877 = vmatpush.xpose.msra.mxu0 0.0
      %878 = vmatpush.xpose.msra.mxu0 0.0
      %879 = vmatpush.xpose.msra.mxu0 0.0
      %880 = vmatpush.xpose.msra.mxu0 0.0
      %881 = vmatpush.xpose.msra.mxu0 0.0
      %882 = vmatpush.xpose.msra.mxu0 0.0
      %883 = vmatpush.xpose.msra.mxu0 0.0
      %884 = vmatpush.xpose.msra.mxu0 0.0
      %885 = vmatpush.xpose.msra.mxu0 0.0
      %886 = vmatpush.xpose.msra.mxu0 0.0
      %887 = vmatpush.xpose.msra.mxu0 0.0
      %888 = vmatpush.xpose.msra.mxu0 %v871
      %889 = vmatmul.f32.gmra.mxu0 %v869
      %v890 = vpop.f32.mrf.mxu0
      %v891 = vadd.f32 0.0, %v890
      %892 = vdwg.mxu0
      %v893 = vmul.f32 %v891, 0.25
      %v894 = vadd.f32 %v893, %v824
      %v895 = vsel %vm827, %v894, -inf
      %896 = vmax.xlane.f32.xlu0 %v895
      %v897 = vpop.xlane.xlu0 %896
      %v898 = vsub.f32 %v894, %v897
      %v899 = vmul.f32 %v898, 1.442695
      %v900 = vpow.pop %v899
      %v901 = vsel %vm827, %v900, 0.0
      %902 = vadd.xlane.f32.xlu0 %v901
      %v903 = vpop.xlane.xlu0 %902
      %v904 = vrcp.pop %v903
      %v905 = vmul.f32 %v900, %v904
      %906 = vrot.lane.b32.xlu0 %v788, 48
      %v907 = vpop.permute.xlu0 %906
      %v910 = vsel %vm827, %v905, 0
      %912 = vmatpush.msra.mxu0 0.0
      %913 = vmatpush.msra.mxu0 0.0
      %914 = vmatpush.msra.mxu0 0.0
      %915 = vmatpush.msra.mxu0 0.0
      %916 = vmatpush.msra.mxu0 0.0
      %917 = vmatpush.msra.mxu0 0.0
      %918 = vmatpush.msra.mxu0 0.0
      %919 = vmatpush.msra.mxu0 0.0
      %920 = vmatpush.msra.mxu0 0.0
      %921 = vmatpush.msra.mxu0 0.0
      %922 = vmatpush.msra.mxu0 0.0
      %923 = vmatpush.msra.mxu0 0.0
      %924 = vmatpush.msra.mxu0 0.0
      %925 = vmatpush.msra.mxu0 0.0
      %926 = vmatpush.msra.mxu0 0.0
      %927 = vmatpush.msra.mxu0 %v907
      %928 = vmatmul.f32.gmra.mxu0 %v910
      %v929 = vpop.f32.mrf.mxu0
      %v930 = vadd.f32 0.0, %v929
      %931 = vdwg.mxu0
      %v933 = vsel %vm797, %v930, 0
      %935 = vmatpush.msra.mxu0 0.0
      %936 = vmatpush.msra.mxu0 0.0
      %937 = vmatpush.msra.mxu0 0.0
      %938 = vmatpush.msra.mxu0 0.0
      %939 = vmatpush.msra.mxu0 0.0
      %940 = vmatpush.msra.mxu0 0.0
      %941 = vmatpush.msra.mxu0 0.0
      %942 = vmatpush.msra.mxu0 0.0
      %943 = vmatpush.msra.mxu0 0.0
      %944 = vmatpush.msra.mxu0 0.0
      %945 = vmatpush.msra.mxu0 0.0
      %946 = vmatpush.msra.mxu0 0.0
      %947 = vmatpush.msra.mxu0 0.0
      %948 = vmatpush.msra.mxu0 0.0
      %949 = vmatpush.msra.mxu0 %v793
      %950 = vmatpush.msra.mxu0 %v792
      %951 = vmatmul.f32.gmra.mxu0 %v933
      %v952 = vpop.f32.mrf.mxu0
      %v953 = vadd.f32 0.0, %v952
      %954 = vdwg.mxu0
      %v956 = vsel %vm797, %v863, 0
      %958 = vmatpush.msra.mxu0 0.0
      %959 = vmatpush.msra.mxu0 0.0
      %960 = vmatpush.msra.mxu0 0.0
      %961 = vmatpush.msra.mxu0 0.0
      %962 = vmatpush.msra.mxu0 0.0
      %963 = vmatpush.msra.mxu0 0.0
      %964 = vmatpush.msra.mxu0 0.0
      %965 = vmatpush.msra.mxu0 0.0
      %966 = vmatpush.msra.mxu0 0.0
      %967 = vmatpush.msra.mxu0 0.0
      %968 = vmatpush.msra.mxu0 0.0
      %969 = vmatpush.msra.mxu0 0.0
      %970 = vmatpush.msra.mxu0 0.0
      %971 = vmatpush.msra.mxu0 0.0
      %972 = vmatpush.msra.mxu0 %v791
      %973 = vmatpush.msra.mxu0 %v790
      %974 = vmatmul.f32.gmra.mxu0 %v956
      %v975 = vpop.f32.mrf.mxu0
      %v976 = vadd.f32 %v953, %v975
      %977 = vdwg.mxu0
      %v978 = vld [vmem:[%s11] sm:$0x1]
      %v980 = vperm.slane %v978, 0
      %v982 = vadd.f32 %v976, %v980
      %v983 = vadd.f32 %v754, %v982
      %v984 = vld [vmem:[%s12] sm:$0x1]
      %v985 = vld [vmem:[%s13] sm:$0x1]
      %v986 = vsel %vm717, %v983, 0.0
      %987 = vadd.xlane.f32.xlu0 %v986
      %v988 = vpop.xlane.xlu0 %987
      %v989 = vmul.f32 %v988, %v727
      %v990 = vsub.f32 %v983, %v989
      %v991 = vmul.f32 %v990, %v990
      %v992 = vsel %vm717, %v991, 0.0
      %993 = vadd.xlane.f32.xlu0 %v992
      %v994 = vpop.xlane.xlu0 %993
      %v995 = vmul.f32 %v994, %v727
      %v996 = vadd.f32 %v995, 1e-12
      %v997 = vrsqrt.pop %v996
      %v998 = vmul.f32 %v997, %v996
      %v999 = vmul.f32 %v998, %v997
      %v1000 = vmul.f32 0.5, %v999
      %v1001 = vsub.f32 1.5, %v1000
      %v1002 = vmul.f32 %v997, %v1001
      %vm1003 = vweird.f32 %v996
      %vm1004 = vweird.f32 %v997
      %vm1005 = vmor %vm1003, %vm1004
      %v1006 = vsel %vm1005, %v997, %v1002
      %v1007 = vmul.f32 %v990, %v1006
      %v1009 = vperm.slane %v984, 0
      %v1011 = vmul.f32 %v1007, %v1009
      %v1013 = vperm.slane %v985, 0
      %v1015 = vadd.f32 %v1011, %v1013
      %v1016 = vld [vmem:[%s14] sm:$0xff]
      %v1017 = vld [vmem:[%s14 + $0x8] sm:$0xff]
      %v1018 = vld [vmem:[%s14 + $0x10] sm:$0xff]
      %v1019 = vld [vmem:[%s14 + $0x18] sm:$0xff]
      %v1020 = vld [vmem:[%s15] sm:$0x1]
      %v1022 = vperm.slane %v1020, 0
      %v1025 = vsel %vm717, %v1015, 0
      %1027 = vmatpush.msra.mxu0 0.0
      %1028 = vmatpush.msra.mxu0 0.0
      %1029 = vmatpush.msra.mxu0 0.0
      %1030 = vmatpush.msra.mxu0 0.0
      %1031 = vmatpush.msra.mxu0 0.0
      %1032 = vmatpush.msra.mxu0 0.0
      %1033 = vmatpush.msra.mxu0 0.0
      %1034 = vmatpush.msra.mxu0 0.0
      %1035 = vmatpush.msra.mxu0 0.0
      %1036 = vmatpush.msra.mxu0 0.0
      %1037 = vmatpush.msra.mxu0 0.0
      %1038 = vmatpush.msra.mxu0 0.0
      %1039 = vmatpush.msra.mxu0 %v1019
      %1040 = vmatpush.msra.mxu0 %v1018
      %1041 = vmatpush.msra.mxu0 %v1017
      %1042 = vmatpush.msra.mxu0 %v1016
      %1043 = vmatmul.f32.gmra.mxu0 %v1025
      %v1044 = vpop.f32.mrf.mxu0
      %v1045 = vadd.f32 %v1022, %v1044
      %1046 = vdwg.mxu0
      %v1047 = vmul.f32 %v1045, 0.5
      %v1048 = vmul.f32 %v1045, 0.044715
      %v1049 = vmul.f32 %v1048, %v1045
      %v1050 = vmul.f32 %v1049, %v1045
      %v1051 = vadd.f32 %v1045, %v1050
      %v1052 = vmul.f32 %v1051, 0.7978846
      %v1053 = vtanh.pop %v1052
      %v1054 = vadd.f32 %v1053, 1.0
      %v1055 = vmul.f32 %v1047, %v1054
      %v1056 = vld [vmem:[%s16] sm:$0xff]
      %v1057 = vld [vmem:[%s16 + $0x8] sm:$0xff]
      %v1058 = vld [vmem:[%s16 + $0x10] sm:$0xff]
      %v1059 = vld [vmem:[%s16 + $0x18] sm:$0xff]
      %v1060 = vld [vmem:[%s16 + $0x20] sm:$0xff]
      %v1061 = vld [vmem:[%s16 + $0x28] sm:$0xff]
      %v1062 = vld [vmem:[%s16 + $0x30] sm:$0xff]
      %v1063 = vld [vmem:[%s16 + $0x38] sm:$0xff]
      %v1064 = vld [vmem:[%s17] sm:$0x1]
      %v1066 = vperm.slane %v1064, 0
      %v1069 = vsel %vm677, %v1055, 0
      %1071 = vmatpush.msra.mxu0 0.0
      %1072 = vmatpush.msra.mxu0 0.0
      %1073 = vmatpush.msra.mxu0 0.0
      %1074 = vmatpush.msra.mxu0 0.0
      %1075 = vmatpush.msra.mxu0 0.0
      %1076 = vmatpush.msra.mxu0 0.0
      %1077 = vmatpush.msra.mxu0 0.0
      %1078 = vmatpush.msra.mxu0 0.0
      %1079 = vmatpush.msra.mxu0 %v1063
      %1080 = vmatpush.msra.mxu0 %v1062
      %1081 = vmatpush.msra.mxu0 %v1061
      %1082 = vmatpush.msra.mxu0 %v1060
      %1083 = vmatpush.msra.mxu0 %v1059
      %1084 = vmatpush.msra.mxu0 %v1058
      %1085 = vmatpush.msra.mxu0 %v1057
      %1086 = vmatpush.msra.mxu0 %v1056
      %1087 = vmatmul.f32.gmra.mxu0 %v1069
      %v1088 = vpop.f32.mrf.mxu0
      %v1089 = vadd.f32 %v1066, %v1088
      %1090 = vdwg.mxu0
      %v1091 = vadd.f32 %v1015, %v1089
      %v1092 = vld [vmem:[%s18] sm:$0x1]
      %v1093 = vld [vmem:[%s19] sm:$0x1]
      %v1094 = vsel %vm717, %v1091, 0.0
      %1095 = vadd.xlane.f32.xlu0 %v1094
      %v1096 = vpop.xlane.xlu0 %1095
      %v1097 = vmul.f32 %v1096, %v727
      %v1098 = vsub.f32 %v1091, %v1097
      %v1099 = vmul.f32 %v1098, %v1098
      %v1100 = vsel %vm717, %v1099, 0.0
      %1101 = vadd.xlane.f32.xlu0 %v1100
      %v1102 = vpop.xlane.xlu0 %1101
      %v1103 = vmul.f32 %v1102, %v727
      %v1104 = vadd.f32 %v1103, 1e-12
      %v1105 = vrsqrt.pop %v1104
      %v1106 = vmul.f32 %v1105, %v1104
      %v1107 = vmul.f32 %v1106, %v1105
      %v1108 = vmul.f32 0.5, %v1107
      %v1109 = vsub.f32 1.5, %v1108
      %v1110 = vmul.f32 %v1105, %v1109
      %vm1111 = vweird.f32 %v1104
      %vm1112 = vweird.f32 %v1105
      %vm1113 = vmor %vm1111, %vm1112
      %v1114 = vsel %vm1113, %v1105, %v1110
      %v1115 = vmul.f32 %v1098, %v1114
      %v1117 = vperm.slane %v1092, 0
      %v1119 = vmul.f32 %v1115, %v1117
      %v1121 = vperm.slane %v1093, 0
      %v1123 = vadd.f32 %v1119, %v1121
      %1124 = vst.msk [vmem:[%s655] sm:$0xff] %vm717, %v1123
      %p1125 = scmp.lt.s32.totalorder %s31, 1
      %s1126 = scalar_select %p1125, %s31, 1
      %s1127 = smul.addr %s1126, 8
      %s1128 = scalar_lea.vmem %s20, %s1127
      // Predicated region
      $region101: #{encoder_forward.1} parent=99 // pred_check
        %p1129 = pneg %p484
      $region102: #{encoder_forward.1} parent=99 // pred_check_branch
        %1131 = sbr.rel (%p1129) target = $region104
      $region103: #{encoder_forward.1} parent=99 // pred_region
        _
      $region104: #{encoder_forward.1} parent=99 // pred_fallthru
        _
    $region100: #{encoder_forward.1} parent=5 // pred_fallthru
      _
    %p1132 = scmp.le.s32.totalorder 2, %s26
    // Predicated region
    $region105: #{encoder_forward.1} parent=5 // pred_check
      %p1133 = pneg %p1132
    $region106: #{encoder_forward.1} parent=5 // pred_check_branch
      %1135 = sbr.rel (%p1133) target = $region108
    $region107: #{encoder_forward.1} parent=5 // pred_region
      %s1136 = ssub.s32 %s26, 2
      // Predicated region
      $region109: #{encoder_forward.1} parent=107 // pred_check
        %p1137 = pneg %p490
      $region110: #{encoder_forward.1} parent=107 // pred_check_branch
        %1139 = sbr.rel (%p1137) target = $region112
      $region111: #{encoder_forward.1} parent=107 // pred_region
        %p1140 = scmp.lt.s32.totalorder %s32, 1
        %s1141 = scalar_select %p1140, %s32, 1
        %s1142 = smul.addr %s1141, 8
        %s1143 = scalar_lea.vmem %s20, %s1142
      $region112: #{encoder_forward.1} parent=107 // pred_fallthru
        _
    $region108: #{encoder_forward.1} parent=5 // pred_fallthru
      _
  $region6: #{encoder_forward.1} parent=0 // loop_footer
    %s30 = sadd.s32 1, %s26
  $region7: #{encoder_forward.1} parent=0 // loop_footer_branch
    %25 = sbr.rel target = $region3
  $region8: #{encoder_forward.1} parent=0 // loop_exit
    _

</llo_original>
